<compile_context>
chip_gen: v6e
topology: v6e:2x2x1
jax: 0.10.0
libtpu: 0.0.40
codegen_flags: <defaults>
</compile_context>

<pallas_src>
import functools

import numpy as np
import jax
import jax.numpy as jnp
from jax import lax
from jax.experimental import pallas as pl
from jax.experimental.pallas import tpu as pltpu


# ------------------------------ tiling knobs --------------------------------

# Per-tile x is tm*K*2B <= ~1.2 MB even at tm=1024 (K<=576): nowhere near any
# chip's VMEM, so no capacity heuristic -- just a large tile (fewer grid steps,
# each step costs ~0.35us of pipeline overhead).
_TILE_M = 1024
_VMEM_LIMIT = 32 * 1024 * 1024


def _round_up(x, m):
    return ((x + m - 1) // m) * m


def _pick_tile(m, cap):
    """Row tile: as big as allowed, but keep >=2 grid steps when m is large
    enough so the 'parallel' axis can shard across v7x's two TensorCores.
    Multiples of 16 keep bf16 sublane tiling happy; tiny m uses the full dim."""
    if m <= 16:
        return m
    half = -(-m // 2)
    return min(cap, _round_up(half, 16))


# ------------------------------ Pallas kernels ------------------------------

def _matmul_bias_kernel(x_ref, w_ref, b_ref, o_ref, *, relu):
    """o = relu?(x @ w + b).  bf16 operands, f32 accumulation on the MXU."""
    x = x_ref[...].astype(jnp.bfloat16)
    w = w_ref[...].astype(jnp.bfloat16)
    y = jnp.dot(x, w, preferred_element_type=jnp.float32) + b_ref[...]
    if relu:
        y = jnp.maximum(y, 0.0)
    o_ref[...] = y.astype(o_ref.dtype)


def linear_pallas(x, w, b, *, relu, out_dtype=jnp.float32, tile_m=_TILE_M):
    """Tiled y = relu?(x @ w + b).  x:(M,K) bf16, w:(K,N) bf16, b:(N,) f32."""
    M, K = x.shape
    N = w.shape[1]
    tm = _pick_tile(M, tile_m)
    grid_m = pl.cdiv(M, tm)
    kern = functools.partial(_matmul_bias_kernel, relu=relu)
    out_isz = np.dtype(out_dtype).itemsize
    cost = pl.CostEstimate(
        flops=2 * M * K * N,
        transcendentals=0,
        bytes_accessed=(M * K * x.dtype.itemsize + K * N * w.dtype.itemsize
                        + N * 4 + M * N * out_isz))
    return pl.pallas_call(
        kern,
        out_shape=jax.ShapeDtypeStruct((M, N), out_dtype),
        grid=(grid_m,),
        in_specs=[
            pl.BlockSpec((tm, K), lambda i: (i, 0)),
            pl.BlockSpec((K, N), lambda i: (0, 0)),
            pl.BlockSpec((1, N), lambda i: (0, 0)),
        ],
        out_specs=pl.BlockSpec((tm, N), lambda i: (i, 0)),
        compiler_params=pltpu.CompilerParams(
            dimension_semantics=("parallel",),
            vmem_limit_bytes=_VMEM_LIMIT,
            # Let XLA fuse the slice/stack im2col producer into the patches
            # operand (removes the patch-matrix HBM write+read when it fuses).
            allow_input_fusion=[True, False, False],
        ),
        cost_estimate=cost,
    )(x, w, b.reshape(1, N))


def _dueling_head_kernel(feat_ref, wh_ref, bh_ref, wva_ref, bva_ref, o_ref):
    """Fused dueling head:
       h           = relu(feat @ [Wv1 | Wa1] + [bv1 | ba1])
       [value|adv] = h @ blockdiag(Wv2, Wa2) + [bv2 | ba2]
       out         = value + adv - mean(adv, axis=1, keepdims=True)
    """
    f = feat_ref[...].astype(jnp.bfloat16)
    h = jnp.dot(f, wh_ref[...].astype(jnp.bfloat16),
                preferred_element_type=jnp.float32) + bh_ref[...]
    h = jnp.maximum(h, 0.0).astype(jnp.bfloat16)
    va = jnp.dot(h, wva_ref[...].astype(jnp.bfloat16),
                 preferred_element_type=jnp.float32) + bva_ref[...]
    value = va[:, :1]
    adv = va[:, 1:]
    o_ref[...] = value + adv - jnp.mean(adv, axis=1, keepdims=True)


def dueling_head_pallas(feat, wh, bh, wva, bva, *, tile_b=512):
    B, F = feat.shape
    H2 = wh.shape[1]              # 2 * hidden
    NA = wva.shape[1]             # 1 + n_actions
    A = NA - 1
    tb = _pick_tile(B, tile_b)
    grid_b = pl.cdiv(B, tb)
    cost = pl.CostEstimate(
        flops=2 * B * F * H2 + 2 * B * H2 * NA,
        transcendentals=0,
        bytes_accessed=(B * F * feat.dtype.itemsize + F * H2 * wh.dtype.itemsize
                        + H2 * 4 + H2 * NA * wva.dtype.itemsize + NA * 4
                        + B * A * 4))
    return pl.pallas_call(
        _dueling_head_kernel,
        out_shape=jax.ShapeDtypeStruct((B, A), jnp.float32),
        grid=(grid_b,),
        in_specs=[
            pl.BlockSpec((tb, F), lambda i: (i, 0)),
            pl.BlockSpec((F, H2), lambda i: (0, 0)),
            pl.BlockSpec((1, H2), lambda i: (0, 0)),
            pl.BlockSpec((H2, NA), lambda i: (0, 0)),
            pl.BlockSpec((1, NA), lambda i: (0, 0)),
        ],
        out_specs=pl.BlockSpec((tb, A), lambda i: (i, 0)),
        compiler_params=pltpu.CompilerParams(
            dimension_semantics=("parallel",),
            vmem_limit_bytes=_VMEM_LIMIT,
        ),
        cost_estimate=cost,
    )(feat, wh, bh.reshape(1, H2), wva, bva.reshape(1, NA))


# --------------------------- im2col (fusible HLOs) ---------------------------

def _extract_patches(y, k, s):
    """im2col on NHWC `y` via strided slices + stack (fusible data movement).

    Output feature order is (C, kh, kw), exactly matching PyTorch's
    Conv2d weight flatten (cout, cin*kh*kw)."""
    B, H, W, C = y.shape
    ho = (H - k) // s + 1
    wo = (W - k) // s + 1
    slabs = []
    for kh in range(k):
        for kw in range(k):
            slabs.append(lax.slice(
                y, (0, kh, kw, 0),
                (B, kh + (ho - 1) * s + 1, kw + (wo - 1) * s + 1, C),
                (1, s, s, 1)))                      # (B, ho, wo, C)
    p = jnp.stack(slabs, axis=-1)                   # (B, ho, wo, C, k*k)
    return p.reshape(B * ho * wo, C * k * k), ho, wo


# ------------------------------- params init --------------------------------

def _scale_noise(key, size):
    x = jax.random.normal(key, (size,), dtype=jnp.float32)
    return jnp.sign(x) * jnp.sqrt(jnp.abs(x))


def make_noisy_linear_params(key, in_f, out_f, sigma_init=0.5):
    """Effective (weight, bias) of a NoisyLinear: mu + sigma * factored noise."""
    k1, k2, k3, k4 = jax.random.split(key, 4)
    mu_range = 1.0 / np.sqrt(in_f)
    w_mu = jax.random.uniform(k1, (out_f, in_f), jnp.float32, -mu_range, mu_range)
    w_sigma = jnp.full((out_f, in_f), sigma_init / np.sqrt(in_f), jnp.float32)
    b_mu = jax.random.uniform(k2, (out_f,), jnp.float32, -mu_range, mu_range)
    b_sigma = jnp.full((out_f,), sigma_init / np.sqrt(out_f), jnp.float32)
    eps_in = _scale_noise(k3, in_f)
    eps_out = _scale_noise(k4, out_f)
    w = w_mu + w_sigma * jnp.outer(eps_out, eps_in)
    b = b_mu + b_sigma * eps_out
    return w.T, b                                   # (in_f, out_f), (out_f,)


def make_conv_params(key, cin, cout, k):
    """Conv2d weight flattened for im2col matmul: (cin*k*k, cout), (C,kh,kw) order."""
    k1, k2 = jax.random.split(key)
    fan_in = cin * k * k
    bound = 1.0 / np.sqrt(fan_in)
    w = jax.random.uniform(k1, (cout, cin, k, k), jnp.float32, -bound, bound)
    b = jax.random.uniform(k2, (cout,), jnp.float32, -bound, bound)
    return w.reshape(cout, cin * k * k).T, b


def init_params(key, in_channels, spatial, n_actions, hidden=512):
    ks = jax.random.split(key, 7)
    p = {}
    wc1, p["bc1"] = make_conv_params(ks[0], in_channels, 32, 8)
    wc2, p["bc2"] = make_conv_params(ks[1], 32, 64, 4)
    wc3, p["bc3"] = make_conv_params(ks[2], 64, 64, 3)
    h1 = (spatial - 8) // 4 + 1
    h2 = (h1 - 4) // 2 + 1
    h3 = (h2 - 3) // 1 + 1
    conv_out = 64 * h3 * h3
    # TODO(synk): reset_noise() is folded into init -- factored noise is sampled
    # once and baked into the effective (weight, bias); re-sampling is host-side.
    wv1, bv1 = make_noisy_linear_params(ks[3], conv_out, hidden)
    wv2, bv2 = make_noisy_linear_params(ks[4], hidden, 1)
    wa1, ba1 = make_noisy_linear_params(ks[5], conv_out, hidden)
    wa2, ba2 = make_noisy_linear_params(ks[6], hidden, n_actions)

    # Fuse the two hidden NoisyLinears side by side -> one matmul, and
    # pre-permute input rows from PyTorch (C,H,W)-flatten order to the NHWC
    # flatten order the conv trunk produces (removes a runtime transpose).
    wh = jnp.concatenate([wv1, wa1], axis=1)                 # (conv_out, 2*hidden)
    perm = np.arange(conv_out).reshape(64, h3, h3).transpose(1, 2, 0).reshape(-1)
    wh = wh[perm]
    p["bh"] = jnp.concatenate([bv1, ba1], axis=0)            # (2*hidden,)

    # Fuse value/advantage projections into one block-diagonal matmul that
    # emits [value | advantage] in a single MXU pass.
    wva = jnp.zeros((2 * hidden, 1 + n_actions), jnp.float32)
    wva = wva.at[:hidden, :1].set(wv2)
    wva = wva.at[hidden:, 1:].set(wa2)
    p["bva"] = jnp.concatenate([bv2, ba2], axis=0)           # (1 + A,)

    # Matmul weights stored in bf16 (native MXU dtype, half the weight DMA).
    for name, w in (("wc1", wc1), ("wc2", wc2), ("wc3", wc3),
                    ("wh", wh), ("wva", wva)):
        p[name] = w.astype(jnp.bfloat16)
    return p


# ------------------------------- forward pass --------------------------------

_CONV_SPECS = (("wc1", "bc1", 8, 4), ("wc2", "bc2", 4, 2), ("wc3", "bc3", 3, 1))


@jax.jit
def dueling_dqn_forward(x, params):
    """x: (B, C, H, W) float32 NCHW -> (B, n_actions) float32."""
    B = x.shape[0]
    # Single layout conversion at the boundary; stay NHWC (channels-last) after.
    y = jnp.transpose(x, (0, 2, 3, 1)).astype(jnp.bfloat16)

    for wname, bname, k, s in _CONV_SPECS:
        patches, ho, wo = _extract_patches(y, k, s)
        cout = params[wname].shape[1]
        y = linear_pallas(patches, params[wname], params[bname],
                          relu=True, out_dtype=jnp.bfloat16)
        y = y.reshape(B, ho, wo, cout)

    # NHWC flatten (free reshape); wh's rows were pre-permuted at init to match.
    feat = y.reshape(B, -1)

    # Fully fused dueling head: hidden layers + [value|adv] + mean-subtraction.
    return dueling_head_pallas(feat, params["wh"], params["bh"],
                               params["wva"], params["bva"])


if __name__ == "__main__":
    # 36x36 inputs give a 1x1 final conv map (conv_out_size = 64): the smallest
    # spatial size the 8/4/3-kernel trunk supports. batch=2, channels=4, 6 actions.
    B, C, S, N_ACTIONS = 2, 4, 36, 6

    key = jax.random.PRNGKey(0)
    kx, kp = jax.random.split(key)
    x = jax.random.normal(kx, (B, C, S, S), dtype=jnp.float32)
    params = init_params(kp, C, S, N_ACTIONS)

    out = jax.block_until_ready(dueling_dqn_forward(x, params))
    assert out.shape == (B, N_ACTIONS) and out.dtype == jnp.float32
    assert bool(jnp.all(jnp.isfinite(out)))
    print("KERNEL_OK")
</pallas_src>

<mosaic_0001>
module attributes {stable_mosaic.version = 11 : i64} {
  func.func @_matmul_bias_kernel(%arg0: i32, %arg1: memref<64x256xbf16, #tpu.memory_space<vmem>>, %arg2: memref<256x32xbf16, #tpu.memory_space<vmem>>, %arg3: memref<1x32xf32, #tpu.memory_space<vmem>>, %arg4: memref<64x32xbf16, #tpu.memory_space<vmem>>) attributes {dimension_semantics = [#tpu.dimension_semantics<parallel>], iteration_bounds = array<i64: 2>, scalar_prefetch = 0 : i64, scratch_operands = 0 : i64, tpu.core_type = #tpu.core_type<tc>, window_params = [{transform_indices = @transform_0, window_bounds = array<i64: 64, 256>}, {pipeline_mode = #tpu.pipeline_mode<synchronous>, transform_indices = @transform_1, window_bounds = array<i64: 256, 32>}, {pipeline_mode = #tpu.pipeline_mode<synchronous>, transform_indices = @transform_2, window_bounds = array<i64: 1, 32>}, {transform_indices = @transform_3, window_bounds = array<i64: 64, 32>}]} {
    %c0 = arith.constant 0 : index
    %c0_0 = arith.constant 0 : index
    %0 = vector.load %arg1[%c0, %c0_0] : memref<64x256xbf16, #tpu.memory_space<vmem>>, vector<64x256xbf16>
    %c0_1 = arith.constant 0 : index
    %c0_2 = arith.constant 0 : index
    %1 = vector.load %arg2[%c0_1, %c0_2] : memref<256x32xbf16, #tpu.memory_space<vmem>>, vector<256x32xbf16>
    %cst = arith.constant dense<0.000000e+00> : vector<64x32xf32>
    %2 = tpu.matmul %0, %1, %cst {dimension_numbers = #tpu.dot_dimension_numbers<[1], [0], [0], [1], [0, 0, 1, 1], [], []>} : vector<64x256xbf16>, vector<256x32xbf16>, vector<64x32xf32> -> vector<64x32xf32>
    %c0_3 = arith.constant 0 : index
    %c0_4 = arith.constant 0 : index
    %3 = vector.load %arg3[%c0_3, %c0_4] : memref<1x32xf32, #tpu.memory_space<vmem>>, vector<1x32xf32>
    %4 = vector.broadcast %3 : vector<1x32xf32> to vector<64x32xf32>
    %5 = arith.addf %2, %4 : vector<64x32xf32>
    %cst_5 = arith.constant 0.000000e+00 : f32
    %6 = vector.broadcast %cst_5 : f32 to vector<64x32xf32>
    %7 = arith.maximumf %5, %6 : vector<64x32xf32>
    %8 = arith.truncf %7 : vector<64x32xf32> to vector<64x32xbf16>
    %c0_6 = arith.constant 0 : index
    %c0_7 = arith.constant 0 : index
    %9 = vector.load %arg4[%c0_6, %c0_7] : memref<64x32xbf16, #tpu.memory_space<vmem>>, vector<64x32xbf16>
    tpu.vector_store %arg4[%c0_6, %c0_7], %8 {strides = array<i32>} : memref<64x32xbf16, #tpu.memory_space<vmem>>, vector<64x32xbf16>,
    return
  }
  func.func @transform_0(%arg0: i32) -> (i32, i32) {
    %c0_i32 = arith.constant 0 : i32
    %c0_i32_0 = arith.constant 0 : i32
    return %arg0, %c0_i32 : i32, i32
  }
  func.func @transform_1(%arg0: i32) -> (i32, i32) {
    %c0_i32 = arith.constant 0 : i32
    %c0_i32_0 = arith.constant 0 : i32
    %c0_i32_1 = arith.constant 0 : i32
    return %c0_i32, %c0_i32_0 : i32, i32
  }
  func.func @transform_2(%arg0: i32) -> (i32, i32) {
    %c0_i32 = arith.constant 0 : i32
    %c0_i32_0 = arith.constant 0 : i32
    %c0_i32_1 = arith.constant 0 : i32
    return %c0_i32, %c0_i32_0 : i32, i32
  }
  func.func @transform_3(%arg0: i32) -> (i32, i32) {
    %c0_i32 = arith.constant 0 : i32
    %c0_i32_0 = arith.constant 0 : i32
    return %arg0, %c0_i32 : i32, i32
  }
}

module attributes {stable_mosaic.version = 11 : i64} {
  func.func @_matmul_bias_kernel(%arg0: i32, %arg1: memref<16x512xbf16, #tpu.memory_space<vmem>>, %arg2: memref<512x64xbf16, #tpu.memory_space<vmem>>, %arg3: memref<1x64xf32, #tpu.memory_space<vmem>>, %arg4: memref<16x64xbf16, #tpu.memory_space<vmem>>) attributes {dimension_semantics = [#tpu.dimension_semantics<parallel>], iteration_bounds = array<i64: 2>, scalar_prefetch = 0 : i64, scratch_operands = 0 : i64, tpu.core_type = #tpu.core_type<tc>, window_params = [{transform_indices = @transform_0, window_bounds = array<i64: 16, 512>}, {pipeline_mode = #tpu.pipeline_mode<synchronous>, transform_indices = @transform_1, window_bounds = array<i64: 512, 64>}, {pipeline_mode = #tpu.pipeline_mode<synchronous>, transform_indices = @transform_2, window_bounds = array<i64: 1, 64>}, {transform_indices = @transform_3, window_bounds = array<i64: 16, 64>}]} {
    %c0 = arith.constant 0 : index
    %c0_0 = arith.constant 0 : index
    %0 = vector.load %arg1[%c0, %c0_0] : memref<16x512xbf16, #tpu.memory_space<vmem>>, vector<16x512xbf16>
    %c0_1 = arith.constant 0 : index
    %c0_2 = arith.constant 0 : index
    %1 = vector.load %arg2[%c0_1, %c0_2] : memref<512x64xbf16, #tpu.memory_space<vmem>>, vector<512x64xbf16>
    %cst = arith.constant dense<0.000000e+00> : vector<16x64xf32>
    %2 = tpu.matmul %0, %1, %cst {dimension_numbers = #tpu.dot_dimension_numbers<[1], [0], [0], [1], [0, 0, 1, 1], [], []>} : vector<16x512xbf16>, vector<512x64xbf16>, vector<16x64xf32> -> vector<16x64xf32>
    %c0_3 = arith.constant 0 : index
    %c0_4 = arith.constant 0 : index
    %3 = vector.load %arg3[%c0_3, %c0_4] : memref<1x64xf32, #tpu.memory_space<vmem>>, vector<1x64xf32>
    %4 = vector.broadcast %3 : vector<1x64xf32> to vector<16x64xf32>
    %5 = arith.addf %2, %4 : vector<16x64xf32>
    %cst_5 = arith.constant 0.000000e+00 : f32
    %6 = vector.broadcast %cst_5 : f32 to vector<16x64xf32>
    %7 = arith.maximumf %5, %6 : vector<16x64xf32>
    %8 = arith.truncf %7 : vector<16x64xf32> to vector<16x64xbf16>
    %c0_6 = arith.constant 0 : index
    %c0_7 = arith.constant 0 : index
    %9 = vector.load %arg4[%c0_6, %c0_7] : memref<16x64xbf16, #tpu.memory_space<vmem>>, vector<16x64xbf16>
    tpu.vector_store %arg4[%c0_6, %c0_7], %8 {strides = array<i32>} : memref<16x64xbf16, #tpu.memory_space<vmem>>, vector<16x64xbf16>,
    return
  }
  func.func @transform_0(%arg0: i32) -> (i32, i32) {
    %c0_i32 = arith.constant 0 : i32
    %c0_i32_0 = arith.constant 0 : i32
    return %arg0, %c0_i32 : i32, i32
  }
  func.func @transform_1(%arg0: i32) -> (i32, i32) {
    %c0_i32 = arith.constant 0 : i32
    %c0_i32_0 = arith.constant 0 : i32
    %c0_i32_1 = arith.constant 0 : i32
    return %c0_i32, %c0_i32_0 : i32, i32
  }
  func.func @transform_2(%arg0: i32) -> (i32, i32) {
    %c0_i32 = arith.constant 0 : i32
    %c0_i32_0 = arith.constant 0 : i32
    %c0_i32_1 = arith.constant 0 : i32
    return %c0_i32, %c0_i32_0 : i32, i32
  }
  func.func @transform_3(%arg0: i32) -> (i32, i32) {
    %c0_i32 = arith.constant 0 : i32
    %c0_i32_0 = arith.constant 0 : i32
    return %arg0, %c0_i32 : i32, i32
  }
}

module attributes {stable_mosaic.version = 11 : i64} {
  func.func @_matmul_bias_kernel(%arg0: i32, %arg1: memref<2x576xbf16, #tpu.memory_space<vmem>>, %arg2: memref<576x64xbf16, #tpu.memory_space<vmem>>, %arg3: memref<1x64xf32, #tpu.memory_space<vmem>>, %arg4: memref<2x64xbf16, #tpu.memory_space<vmem>>) attributes {dimension_semantics = [#tpu.dimension_semantics<parallel>], iteration_bounds = array<i64: 1>, scalar_prefetch = 0 : i64, scratch_operands = 0 : i64, tpu.core_type = #tpu.core_type<tc>, window_params = [{transform_indices = @transform_0, window_bounds = array<i64: 2, 576>}, {pipeline_mode = #tpu.pipeline_mode<synchronous>, transform_indices = @transform_1, window_bounds = array<i64: 576, 64>}, {pipeline_mode = #tpu.pipeline_mode<synchronous>, transform_indices = @transform_2, window_bounds = array<i64: 1, 64>}, {transform_indices = @transform_3, window_bounds = array<i64: 2, 64>}]} {
    %c0 = arith.constant 0 : index
    %c0_0 = arith.constant 0 : index
    %0 = vector.load %arg1[%c0, %c0_0] : memref<2x576xbf16, #tpu.memory_space<vmem>>, vector<2x576xbf16>
    %c0_1 = arith.constant 0 : index
    %c0_2 = arith.constant 0 : index
    %1 = vector.load %arg2[%c0_1, %c0_2] : memref<576x64xbf16, #tpu.memory_space<vmem>>, vector<576x64xbf16>
    %cst = arith.constant dense<0.000000e+00> : vector<2x64xf32>
    %2 = tpu.matmul %0, %1, %cst {dimension_numbers = #tpu.dot_dimension_numbers<[1], [0], [0], [1], [0, 0, 1, 1], [], []>} : vector<2x576xbf16>, vector<576x64xbf16>, vector<2x64xf32> -> vector<2x64xf32>
    %c0_3 = arith.constant 0 : index
    %c0_4 = arith.constant 0 : index
    %3 = vector.load %arg3[%c0_3, %c0_4] : memref<1x64xf32, #tpu.memory_space<vmem>>, vector<1x64xf32>
    %4 = vector.broadcast %3 : vector<1x64xf32> to vector<2x64xf32>
    %5 = arith.addf %2, %4 : vector<2x64xf32>
    %cst_5 = arith.constant 0.000000e+00 : f32
    %6 = vector.broadcast %cst_5 : f32 to vector<2x64xf32>
    %7 = arith.maximumf %5, %6 : vector<2x64xf32>
    %8 = arith.truncf %7 : vector<2x64xf32> to vector<2x64xbf16>
    %c0_6 = arith.constant 0 : index
    %c0_7 = arith.constant 0 : index
    %9 = vector.load %arg4[%c0_6, %c0_7] : memref<2x64xbf16, #tpu.memory_space<vmem>>, vector<2x64xbf16>
    tpu.vector_store %arg4[%c0_6, %c0_7], %8 {strides = array<i32>} : memref<2x64xbf16, #tpu.memory_space<vmem>>, vector<2x64xbf16>,
    return
  }
  func.func @transform_0(%arg0: i32) -> (i32, i32) {
    %c0_i32 = arith.constant 0 : i32
    %c0_i32_0 = arith.constant 0 : i32
    return %arg0, %c0_i32 : i32, i32
  }
  func.func @transform_1(%arg0: i32) -> (i32, i32) {
    %c0_i32 = arith.constant 0 : i32
    %c0_i32_0 = arith.constant 0 : i32
    %c0_i32_1 = arith.constant 0 : i32
    return %c0_i32, %c0_i32_0 : i32, i32
  }
  func.func @transform_2(%arg0: i32) -> (i32, i32) {
    %c0_i32 = arith.constant 0 : i32
    %c0_i32_0 = arith.constant 0 : i32
    %c0_i32_1 = arith.constant 0 : i32
    return %c0_i32, %c0_i32_0 : i32, i32
  }
  func.func @transform_3(%arg0: i32) -> (i32, i32) {
    %c0_i32 = arith.constant 0 : i32
    %c0_i32_0 = arith.constant 0 : i32
    return %arg0, %c0_i32 : i32, i32
  }
}

module attributes {stable_mosaic.version = 11 : i64} {
  func.func @_dueling_head_kernel(%arg0: i32, %arg1: memref<2x64xbf16, #tpu.memory_space<vmem>>, %arg2: memref<64x1024xbf16, #tpu.memory_space<vmem>>, %arg3: memref<1x1024xf32, #tpu.memory_space<vmem>>, %arg4: memref<1024x7xbf16, #tpu.memory_space<vmem>>, %arg5: memref<1x7xf32, #tpu.memory_space<vmem>>, %arg6: memref<2x6xf32, #tpu.memory_space<vmem>>) attributes {dimension_semantics = [#tpu.dimension_semantics<parallel>], iteration_bounds = array<i64: 1>, scalar_prefetch = 0 : i64, scratch_operands = 0 : i64, tpu.core_type = #tpu.core_type<tc>, window_params = [{transform_indices = @transform_0, window_bounds = array<i64: 2, 64>}, {pipeline_mode = #tpu.pipeline_mode<synchronous>, transform_indices = @transform_1, window_bounds = array<i64: 64, 1024>}, {pipeline_mode = #tpu.pipeline_mode<synchronous>, transform_indices = @transform_2, window_bounds = array<i64: 1, 1024>}, {pipeline_mode = #tpu.pipeline_mode<synchronous>, transform_indices = @transform_3, window_bounds = array<i64: 1024, 7>}, {pipeline_mode = #tpu.pipeline_mode<synchronous>, transform_indices = @transform_4, window_bounds = array<i64: 1, 7>}, {transform_indices = @transform_5, window_bounds = array<i64: 2, 6>}]} {
    %c0 = arith.constant 0 : index
    %c0_0 = arith.constant 0 : index
    %0 = vector.load %arg1[%c0, %c0_0] : memref<2x64xbf16, #tpu.memory_space<vmem>>, vector<2x64xbf16>
    %c0_1 = arith.constant 0 : index
    %c0_2 = arith.constant 0 : index
    %1 = vector.load %arg2[%c0_1, %c0_2] : memref<64x1024xbf16, #tpu.memory_space<vmem>>, vector<64x1024xbf16>
    %cst = arith.constant dense<0.000000e+00> : vector<2x1024xf32>
    %2 = tpu.matmul %0, %1, %cst {dimension_numbers = #tpu.dot_dimension_numbers<[1], [0], [0], [1], [0, 0, 1, 1], [], []>} : vector<2x64xbf16>, vector<64x1024xbf16>, vector<2x1024xf32> -> vector<2x1024xf32>
    %c0_3 = arith.constant 0 : index
    %c0_4 = arith.constant 0 : index
    %3 = vector.load %arg3[%c0_3, %c0_4] : memref<1x1024xf32, #tpu.memory_space<vmem>>, vector<1x1024xf32>
    %4 = vector.broadcast %3 : vector<1x1024xf32> to vector<2x1024xf32>
    %5 = arith.addf %2, %4 : vector<2x1024xf32>
    %cst_5 = arith.constant 0.000000e+00 : f32
    %6 = vector.broadcast %cst_5 : f32 to vector<2x1024xf32>
    %7 = arith.maximumf %5, %6 : vector<2x1024xf32>
    %8 = arith.truncf %7 : vector<2x1024xf32> to vector<2x1024xbf16>
    %c0_6 = arith.constant 0 : index
    %c0_7 = arith.constant 0 : index
    %9 = vector.load %arg4[%c0_6, %c0_7] : memref<1024x7xbf16, #tpu.memory_space<vmem>>, vector<1024x7xbf16>
    %cst_8 = arith.constant dense<0.000000e+00> : vector<2x7xf32>
    %10 = tpu.matmul %8, %9, %cst_8 {dimension_numbers = #tpu.dot_dimension_numbers<[1], [0], [0], [1], [0, 0, 1, 1], [], []>} : vector<2x1024xbf16>, vector<1024x7xbf16>, vector<2x7xf32> -> vector<2x7xf32>
    %c0_9 = arith.constant 0 : index
    %c0_10 = arith.constant 0 : index
    %11 = vector.load %arg5[%c0_9, %c0_10] : memref<1x7xf32, #tpu.memory_space<vmem>>, vector<1x7xf32>
    %12 = vector.broadcast %11 : vector<1x7xf32> to vector<2x7xf32>
    %13 = arith.addf %10, %12 : vector<2x7xf32>
    %14 = vector.extract_strided_slice %13 {offsets = [0, 0], sizes = [2, 1], strides = [1, 1]} : vector<2x7xf32> to vector<2x1xf32>
    %15 = vector.extract_strided_slice %13 {offsets = [0, 1], sizes = [2, 6], strides = [1, 1]} : vector<2x7xf32> to vector<2x6xf32>
    %16 = vector.broadcast %14 : vector<2x1xf32> to vector<2x6xf32>
    %17 = arith.addf %16, %15 : vector<2x6xf32>
    %cst_11 = arith.constant dense<0.000000e+00> : vector<2xf32>
    %18 = vector.multi_reduction <add>, %15, %cst_11 [1] : vector<2x6xf32> to vector<2xf32>
    %19 = vector.shape_cast %18 : vector<2xf32> to vector<2x1xf32>
    %cst_12 = arith.constant 6.000000e+00 : f32
    %20 = vector.broadcast %cst_12 : f32 to vector<2x1xf32>
    %21 = arith.divf %19, %20 : vector<2x1xf32>
    %22 = vector.broadcast %21 : vector<2x1xf32> to vector<2x6xf32>
    %23 = arith.subf %17, %22 : vector<2x6xf32>
    %c0_13 = arith.constant 0 : index
    %c0_14 = arith.constant 0 : index
    %24 = vector.load %arg6[%c0_13, %c0_14] : memref<2x6xf32, #tpu.memory_space<vmem>>, vector<2x6xf32>
    tpu.vector_store %arg6[%c0_13, %c0_14], %23 {strides = array<i32>} : memref<2x6xf32, #tpu.memory_space<vmem>>, vector<2x6xf32>,
    return
  }
  func.func @transform_0(%arg0: i32) -> (i32, i32) {
    %c0_i32 = arith.constant 0 : i32
    %c0_i32_0 = arith.constant 0 : i32
    return %arg0, %c0_i32 : i32, i32
  }
  func.func @transform_1(%arg0: i32) -> (i32, i32) {
    %c0_i32 = arith.constant 0 : i32
    %c0_i32_0 = arith.constant 0 : i32
    %c0_i32_1 = arith.constant 0 : i32
    return %c0_i32, %c0_i32_0 : i32, i32
  }
  func.func @transform_2(%arg0: i32) -> (i32, i32) {
    %c0_i32 = arith.constant 0 : i32
    %c0_i32_0 = arith.constant 0 : i32
    %c0_i32_1 = arith.constant 0 : i32
    return %c0_i32, %c0_i32_0 : i32, i32
  }
  func.func @transform_3(%arg0: i32) -> (i32, i32) {
    %c0_i32 = arith.constant 0 : i32
    %c0_i32_0 = arith.constant 0 : i32
    %c0_i32_1 = arith.constant 0 : i32
    return %c0_i32, %c0_i32_0 : i32, i32
  }
  func.func @transform_4(%arg0: i32) -> (i32, i32) {
    %c0_i32 = arith.constant 0 : i32
    %c0_i32_0 = arith.constant 0 : i32
    %c0_i32_1 = arith.constant 0 : i32
    return %c0_i32, %c0_i32_0 : i32, i32
  }
  func.func @transform_5(%arg0: i32) -> (i32, i32) {
    %c0_i32 = arith.constant 0 : i32
    %c0_i32_0 = arith.constant 0 : i32
    return %arg0, %c0_i32 : i32, i32
  }
}

</mosaic_0001>

<llo_original>
// kernel: dueling_dqn_forward.4
$region0: #{dueling_dqn_forward.4}
  #allocation0 [shape = 'u32[]', space=smem, size = 0x4, offset = 0x4, fixed_abs, tag = 'smem constant byte address 0x4 - core index']
  #allocation1 [shape = 'u32[144,128]{1,0:T(1,128)}', space=vmem, size = 0x12000, scoped, tag = 'internal scratch']
  %s0 = inlined_call_operand.vmem [shape: bf16[128,256], index: 0, kind: input, shape index: {}]
  %s1 = inlined_call_operand.vmem [shape: bf16[256,32], index: 1, kind: input, shape index: {}]
  %s2 = inlined_call_operand.vmem [shape: f32[1,32], index: 2, kind: input, shape index: {}]
  %s3 = inlined_call_operand.vmem [shape: bf16[128,32], index: 3, kind: output, shape index: {}]
  %s4 = sld [smem:[#allocation0]]
  $region45: #{dueling_dqn_forward.4} parent=0
    _
  %s6 = ssub.s32 1, %s4
  %s7 = scalar_select 0, %s6, %s4
  loop: start=0, step=1, limit=4
  $region2: #{dueling_dqn_forward.4} parent=0 // loop_pre_header
    _
  $region3: #{dueling_dqn_forward.4} parent=0 // loop_header
    %s9 = sphi 0, %s13
    %p10 = scmp.ge.s32.totalorder %s9, 4
    %s19 = sphi 0, %s21
    %s22 = sphi 0, %s19
    %s23 = sphi 0, %s22
    %s39 = sphi 0, %s23
    %s43 = sphi 0, %s43
    %s45 = sphi 0, %s43
    %s46 = sphi 0, %s45
    %s60 = sphi 0, %s46
    %s64 = sphi 0, %s64
    %s66 = sphi 0, %s64
    %s67 = sphi 0, %s66
    %s81 = sphi 0, %s67
    %s87 = sphi 0, %s89
    %s90 = sphi 0, %s87
    %s91 = sphi 0, %s90
    %s107 = sphi 0, %s91
  $region4: #{dueling_dqn_forward.4} parent=0 // loop_header_branch
    %12 = sbr.rel (%p10) target = $region8
  $region5: #{dueling_dqn_forward.4} parent=0 // loop_body
    %s14 = ssub.s32 %s9, 1
    %s15 = ssub.s32 %s9, 2
    %s16 = sadd.s32 %s9, 1
    %s17 = ssub.s32 %s9, %s16
    %p18 = scmp.eq.s32.totalorder %s17, 0
    %s20 = sadd.s32 %s19, 1
    %s21 = scalar_select %p18, %s19, %s20
    %p24 = pneg %p18
    %p25 = scmp.eq.s32.totalorder %s9, 1
    %p26 = por %p24, %p25
    %p27 = scmp.ne.s32.totalorder %s19, %s22
    %p28 = scmp.eq.s32.totalorder %s9, 0
    %p29 = por %p27, %p28
    %p30 = scmp.ne.s32.totalorder %s19, %s22
    %p31 = scmp.eq.s32.totalorder %s14, 1
    %p32 = por %p30, %p31
    %p33 = scmp.ne.s32.totalorder %s22, %s23
    %p34 = scmp.eq.s32.totalorder %s14, 0
    %p35 = por %p33, %p34
    %p36 = scmp.ne.s32.totalorder %s22, %s23
    %p37 = scmp.eq.s32.totalorder %s15, 1
    %p38 = por %p36, %p37
    %p40 = scmp.ne.s32.totalorder %s23, %s39
    %p41 = scmp.eq.s32.totalorder %s15, 0
    %p42 = por %p40, %p41
    %s44 = sadd.s32 %s43, 1
    %p47 = scmp.eq.s32.totalorder %s9, 1
    %p48 = scmp.ne.s32.totalorder %s43, %s45
    %p49 = scmp.eq.s32.totalorder %s9, 0
    %p50 = por %p48, %p49
    %p51 = scmp.ne.s32.totalorder %s43, %s45
    %p52 = scmp.eq.s32.totalorder %s14, 1
    %p53 = por %p51, %p52
    %p54 = scmp.ne.s32.totalorder %s45, %s46
    %p55 = scmp.eq.s32.totalorder %s14, 0
    %p56 = por %p54, %p55
    %p57 = scmp.ne.s32.totalorder %s45, %s46
    %p58 = scmp.eq.s32.totalorder %s15, 1
    %p59 = por %p57, %p58
    %p61 = scmp.ne.s32.totalorder %s46, %s60
    %p62 = scmp.eq.s32.totalorder %s15, 0
    %p63 = por %p61, %p62
    %s65 = sadd.s32 %s64, 1
    %p68 = scmp.eq.s32.totalorder %s9, 1
    %p69 = scmp.ne.s32.totalorder %s64, %s66
    %p70 = scmp.eq.s32.totalorder %s9, 0
    %p71 = por %p69, %p70
    %p72 = scmp.ne.s32.totalorder %s64, %s66
    %p73 = scmp.eq.s32.totalorder %s14, 1
    %p74 = por %p72, %p73
    %p75 = scmp.ne.s32.totalorder %s66, %s67
    %p76 = scmp.eq.s32.totalorder %s14, 0
    %p77 = por %p75, %p76
    %p78 = scmp.ne.s32.totalorder %s66, %s67
    %p79 = scmp.eq.s32.totalorder %s15, 1
    %p80 = por %p78, %p79
    %p82 = scmp.ne.s32.totalorder %s67, %s81
    %p83 = scmp.eq.s32.totalorder %s15, 0
    %p84 = por %p82, %p83
    %s85 = ssub.s32 %s9, %s16
    %p86 = scmp.eq.s32.totalorder %s85, 0
    %s88 = sadd.s32 %s87, 1
    %s89 = scalar_select %p86, %s87, %s88
    %p92 = pneg %p86
    %p93 = scmp.eq.s32.totalorder %s9, 1
    %p94 = por %p92, %p93
    %p95 = scmp.ne.s32.totalorder %s87, %s90
    %p96 = scmp.eq.s32.totalorder %s9, 0
    %p97 = por %p95, %p96
    %p98 = scmp.ne.s32.totalorder %s87, %s90
    %p99 = scmp.eq.s32.totalorder %s14, 1
    %p100 = por %p98, %p99
    %p101 = scmp.ne.s32.totalorder %s90, %s91
    %p102 = scmp.eq.s32.totalorder %s14, 0
    %p103 = por %p101, %p102
    %p104 = scmp.ne.s32.totalorder %s90, %s91
    %p105 = scmp.eq.s32.totalorder %s15, 1
    %p106 = por %p104, %p105
    %p108 = scmp.ne.s32.totalorder %s91, %s107
    %p109 = scmp.eq.s32.totalorder %s15, 0
    %p110 = por %p108, %p109
    %p111 = scmp.le.s32.totalorder 1, %s9
    %p112 = scmp.lt.s32.totalorder %s9, 3
    %p113 = pnand %p111, %p112
    %p114 = pneg %p113
    // Predicated region
    $region9: #{dueling_dqn_forward.4} parent=5 // pred_check
      _
    $region10: #{dueling_dqn_forward.4} parent=5 // pred_check_branch
      %116 = sbr.rel (%p113) target = $region12
    $region11: #{dueling_dqn_forward.4} parent=5 // pred_region
      %s117 = ssub.s32 %s9, 1
      // Predicated region
      $region13: #{dueling_dqn_forward.4} parent=11 // pred_check
        %p118 = pneg %p56
      $region14: #{dueling_dqn_forward.4} parent=11 // pred_check_branch
        %120 = sbr.rel (%p118) target = $region16
      $region15: #{dueling_dqn_forward.4} parent=11 // pred_region
        _
      $region16: #{dueling_dqn_forward.4} parent=11 // pred_fallthru
        _
      // Predicated region
      $region17: #{dueling_dqn_forward.4} parent=11 // pred_check
        %p121 = pneg %p77
      $region18: #{dueling_dqn_forward.4} parent=11 // pred_check_branch
        %123 = sbr.rel (%p121) target = $region20
      $region19: #{dueling_dqn_forward.4} parent=11 // pred_region
        _
      $region20: #{dueling_dqn_forward.4} parent=11 // pred_fallthru
        _
    $region12: #{dueling_dqn_forward.4} parent=5 // pred_fallthru
      _
    %p124 = scmp.lt.s32.totalorder %s9, 2
    // Predicated region
    $region21: #{dueling_dqn_forward.4} parent=5 // pred_check
      %p125 = pneg %p124
    $region22: #{dueling_dqn_forward.4} parent=5 // pred_check_branch
      %127 = sbr.rel (%p125) target = $region24
    $region23: #{dueling_dqn_forward.4} parent=5 // pred_region
      // Predicated region
      $region25: #{dueling_dqn_forward.4} parent=23 // pred_check
        %p128 = pneg %p29
      $region26: #{dueling_dqn_forward.4} parent=23 // pred_check_branch
        %130 = sbr.rel (%p128) target = $region28
      $region27: #{dueling_dqn_forward.4} parent=23 // pred_region
        %s131 = smul.u32 8, %s9
        %p132 = scmp.lt.s32.totalorder %s131, 15
        %s133 = scalar_select %p132, %s131, 15
        %s134 = smul.addr %s133, 2
        %s135 = smul.addr %s134, 4
        %s136 = scalar_lea.vmem %s0, %s135
        %s137 = smul.u32 8, %s9
      $region28: #{dueling_dqn_forward.4} parent=23 // pred_fallthru
        _
    $region24: #{dueling_dqn_forward.4} parent=5 // pred_fallthru
      _
    %p138 = scmp.le.s32.totalorder 1, %s9
    %p139 = scmp.lt.s32.totalorder %s9, 3
    %p140 = pnand %p138, %p139
    %p141 = pneg %p140
    // Predicated region
    $region29: #{dueling_dqn_forward.4} parent=5 // pred_check
      _
    $region30: #{dueling_dqn_forward.4} parent=5 // pred_check_branch
      %143 = sbr.rel (%p140) target = $region32
    $region31: #{dueling_dqn_forward.4} parent=5 // pred_region
      %s144 = ssub.s32 %s9, 1
      %s145 = smul.u32 8, %s14
      %p146 = scmp.lt.s32.totalorder %s145, 15
      %s147 = scalar_select %p146, %s145, 15
      %s148 = smul.addr %s147, 2
      %s149 = smul.addr %s148, 4
      %s150 = scalar_lea.vmem %s0, %s149
      %p151 = pneg %p35
      %p152 = pneg %p32
      %p153 = pneg %p56
      %p154 = pneg %p53
      %p155 = pneg %p77
      %p156 = pneg %p74
      %p157 = pneg %p103
      %p158 = pneg %p100
      %s159 = smul.u32 8, %s14
      %p160 = scmp.lt.s32.totalorder %s159, 15
      %s161 = scalar_select %p160, %s159, 15
      %s162 = smul.addr %s161, 4
      %s163 = scalar_lea.vmem %s3, %s162
      %s164 = smul.u32 8, %s14
      %p165 = scmp.lt.s32.totalorder %s164, 15
      %s166 = scalar_select %p165, %s164, 15
      %s167 = smul.addr %s166, 2
      %s168 = smul.addr %s167, 4
      %s169 = scalar_lea.vmem %s0, %s168
      %s170 = smul.u32 8, %s14
      %s171 = smul.u32 8, %s14
      %p172 = scmp.lt.s32.totalorder %s171, 15
      %s173 = scalar_select %p172, %s171, 15
      %s174 = smul.addr %s173, 4
      %s175 = scalar_lea.vmem %s3, %s174
      %s176 = smul.u32 8, %s14
      %v178 = vld [vmem:[%s169] sm:$0xff]
      %v179 = vld [vmem:[%s169 + $0x8] sm:$0xff]
      %v180 = vld [vmem:[%s169 + $0x10] sm:$0xff]
      %v181 = vld [vmem:[%s169 + $0x18] sm:$0xff]
      %v182 = vld [vmem:[%s169 + $0x20] sm:$0xff]
      %v183 = vld [vmem:[%s169 + $0x28] sm:$0xff]
      %v184 = vld [vmem:[%s169 + $0x30] sm:$0xff]
      %v185 = vld [vmem:[%s169 + $0x38] sm:$0xff]
      %v186 = vld [vmem:[%s1] sm:$0xf]
      %v187 = vld [vmem:[%s1 + $0x4] sm:$0xf]
      %v188 = vld [vmem:[%s1 + $0x8] sm:$0xf]
      %v189 = vld [vmem:[%s1 + $0xc] sm:$0xf]
      %v190 = vld [vmem:[%s1 + $0x10] sm:$0xf]
      %v191 = vld [vmem:[%s1 + $0x14] sm:$0xf]
      %v192 = vld [vmem:[%s1 + $0x18] sm:$0xf]
      %v193 = vld [vmem:[%s1 + $0x1c] sm:$0xf]
      %v194 = vld [vmem:[%s1 + $0x20] sm:$0xf]
      %v195 = vld [vmem:[%s1 + $0x24] sm:$0xf]
      %v196 = vld [vmem:[%s1 + $0x28] sm:$0xf]
      %v197 = vld [vmem:[%s1 + $0x2c] sm:$0xf]
      %v198 = vld [vmem:[%s1 + $0x30] sm:$0xf]
      %v199 = vld [vmem:[%s1 + $0x34] sm:$0xf]
      %v200 = vld [vmem:[%s1 + $0x38] sm:$0xf]
      %v201 = vld [vmem:[%s1 + $0x3c] sm:$0xf]
      %v202 = vld [vmem:[%s1 + $0x40] sm:$0xf]
      %v203 = vld [vmem:[%s1 + $0x44] sm:$0xf]
      %v204 = vld [vmem:[%s1 + $0x48] sm:$0xf]
      %v205 = vld [vmem:[%s1 + $0x4c] sm:$0xf]
      %v206 = vld [vmem:[%s1 + $0x50] sm:$0xf]
      %v207 = vld [vmem:[%s1 + $0x54] sm:$0xf]
      %v208 = vld [vmem:[%s1 + $0x58] sm:$0xf]
      %v209 = vld [vmem:[%s1 + $0x5c] sm:$0xf]
      %v210 = vld [vmem:[%s1 + $0x60] sm:$0xf]
      %v211 = vld [vmem:[%s1 + $0x64] sm:$0xf]
      %v212 = vld [vmem:[%s1 + $0x68] sm:$0xf]
      %v213 = vld [vmem:[%s1 + $0x6c] sm:$0xf]
      %v214 = vld [vmem:[%s1 + $0x70] sm:$0xf]
      %v215 = vld [vmem:[%s1 + $0x74] sm:$0xf]
      %v216 = vld [vmem:[%s1 + $0x78] sm:$0xf]
      %v217 = vld [vmem:[%s1 + $0x7c] sm:$0xf]
      %v218 = vld [vmem:[%s2] sm:$0x1]
      %v220 = vlaneseq
      %v221 = vshrl.u32 %v220, 7
      %v222 = vsub.s32 0, %v221
      %v223 = vrot.slane %v218, %v222
      %v233 = vunpack.c.l.b16 %v178
      %v234 = vunpack.c.h.b16 %v178
      %v235 = vunpack.c.l.b16 %v179
      %v236 = vunpack.c.h.b16 %v179
      %v237 = vunpack.c.l.b16 %v180
      %v238 = vunpack.c.h.b16 %v180
      %v239 = vunpack.c.l.b16 %v181
      %v240 = vunpack.c.h.b16 %v181
      %v241 = vunpack.c.l.b16 %v182
      %v242 = vunpack.c.h.b16 %v182
      %v243 = vunpack.c.l.b16 %v183
      %v244 = vunpack.c.h.b16 %v183
      %v245 = vunpack.c.l.b16 %v184
      %v246 = vunpack.c.h.b16 %v184
      %v247 = vunpack.c.l.b16 %v185
      %v248 = vunpack.c.h.b16 %v185
      %v249 = vpack.c.b16 %v235, %v233
      %v250 = vpack.c.b16 %v236, %v234
      %v251 = vpack.c.b16 %v239, %v237
      %v252 = vpack.c.b16 %v240, %v238
      %v253 = vpack.c.b16 %v243, %v241
      %v254 = vpack.c.b16 %v244, %v242
      %v255 = vpack.c.b16 %v247, %v245
      %v256 = vpack.c.b16 %v248, %v246
      %v297 = vunpack.c.l.b16 %v186
      %v298 = vunpack.c.l.b16 %v187
      %v299 = vunpack.c.l.b16 %v188
      %v300 = vunpack.c.l.b16 %v189
      %v301 = vunpack.c.l.b16 %v190
      %v302 = vunpack.c.l.b16 %v191
      %v303 = vunpack.c.l.b16 %v192
      %v304 = vunpack.c.l.b16 %v193
      %v305 = vunpack.c.l.b16 %v194
      %v306 = vunpack.c.l.b16 %v195
      %v307 = vunpack.c.l.b16 %v196
      %v308 = vunpack.c.l.b16 %v197
      %v309 = vunpack.c.l.b16 %v198
      %v310 = vunpack.c.l.b16 %v199
      %v311 = vunpack.c.l.b16 %v200
      %v312 = vunpack.c.l.b16 %v201
      %v313 = vunpack.c.l.b16 %v202
      %v314 = vunpack.c.l.b16 %v203
      %v315 = vunpack.c.l.b16 %v204
      %v316 = vunpack.c.l.b16 %v205
      %v317 = vunpack.c.l.b16 %v206
      %v318 = vunpack.c.l.b16 %v207
      %v319 = vunpack.c.l.b16 %v208
      %v320 = vunpack.c.l.b16 %v209
      %v321 = vunpack.c.l.b16 %v210
      %v322 = vunpack.c.l.b16 %v211
      %v323 = vunpack.c.l.b16 %v212
      %v324 = vunpack.c.l.b16 %v213
      %v325 = vunpack.c.l.b16 %v214
      %v326 = vunpack.c.l.b16 %v215
      %v327 = vunpack.c.l.b16 %v216
      %v328 = vunpack.c.l.b16 %v217
      %v329 = vpack.c.b16 %v298, %v297
      %v330 = vpack.c.b16 %v300, %v299
      %v331 = vpack.c.b16 %v302, %v301
      %v332 = vpack.c.b16 %v304, %v303
      %v333 = vpack.c.b16 %v306, %v305
      %v334 = vpack.c.b16 %v308, %v307
      %v335 = vpack.c.b16 %v310, %v309
      %v336 = vpack.c.b16 %v312, %v311
      %v337 = vpack.c.b16 %v314, %v313
      %v338 = vpack.c.b16 %v316, %v315
      %v339 = vpack.c.b16 %v318, %v317
      %v340 = vpack.c.b16 %v320, %v319
      %v341 = vpack.c.b16 %v322, %v321
      %v342 = vpack.c.b16 %v324, %v323
      %v343 = vpack.c.b16 %v326, %v325
      %v344 = vpack.c.b16 %v328, %v327
      %361 = vmatprep.subr.bf16.mxu0 0
      %362 = vmatpush1.bf16.msra.mxu0 %v336
      %363 = vmatprep.subr.bf16.mxu0 0
      %364 = vmatpush1.bf16.msra.mxu0 %v335
      %365 = vmatprep.subr.bf16.mxu0 0
      %366 = vmatpush1.bf16.msra.mxu0 %v334
      %367 = vmatprep.subr.bf16.mxu0 0
      %368 = vmatpush1.bf16.msra.mxu0 %v333
      %369 = vmatprep.subr.bf16.mxu0 0
      %370 = vmatpush1.bf16.msra.mxu0 %v332
      %371 = vmatprep.subr.bf16.mxu0 0
      %372 = vmatpush1.bf16.msra.mxu0 %v331
      %373 = vmatprep.subr.bf16.mxu0 0
      %374 = vmatpush1.bf16.msra.mxu0 %v330
      %375 = vmatprep.subr.bf16.mxu0 0
      %376 = vmatpush1.bf16.msra.mxu0 %v329
      %377 = vmatprep.subr.bf16.mxu0 0
      %378 = vmatpush2.bf16.msra.mxu0 %v344
      %379 = vmatprep.subr.bf16.mxu0 0
      %380 = vmatpush2.bf16.msra.mxu0 %v343
      %381 = vmatprep.subr.bf16.mxu0 0
      %382 = vmatpush2.bf16.msra.mxu0 %v342
      %383 = vmatprep.subr.bf16.mxu0 0
      %384 = vmatpush2.bf16.msra.mxu0 %v341
      %385 = vmatprep.subr.bf16.mxu0 0
      %386 = vmatpush2.bf16.msra.mxu0 %v340
      %387 = vmatprep.subr.bf16.mxu0 0
      %388 = vmatpush2.bf16.msra.mxu0 %v339
      %389 = vmatprep.subr.bf16.mxu0 0
      %390 = vmatpush2.bf16.msra.mxu0 %v338
      %391 = vmatprep.subr.bf16.mxu0 0
      %392 = vmatpush2.bf16.msra.mxu0 %v337
      %393 = vmatprep.mubr.bf16.mxu0 %v250
      %394 = vmatmul.mubr.bf16.gmra.mxu0 %v249
      %v395 = vpop.f32.mrf.mxu0
      %v396 = vadd.f32 %v223, %v395
      %v397 = vpop.f32.mrf.mxu0
      %v398 = vpop.f32.mrf.mxu0
      %v399 = vadd.f32 %v223, %v398
      %v400 = vpop.f32.mrf.mxu0
      %401 = vmatprep.mubr.bf16.mxu0 %v252
      %402 = vmatmul.mubr.bf16.gmra.mxu0 %v251
      %v403 = vpop.f32.mrf.mxu0
      %v404 = vadd.f32 %v223, %v403
      %v405 = vpop.f32.mrf.mxu0
      %v406 = vpop.f32.mrf.mxu0
      %v407 = vadd.f32 %v223, %v406
      %v408 = vpop.f32.mrf.mxu0
      %409 = vmatprep.mubr.bf16.mxu0 %v254
      %410 = vmatmul.mubr.bf16.gmra.mxu0 %v253
      %v411 = vpop.f32.mrf.mxu0
      %v412 = vadd.f32 %v223, %v411
      %v413 = vpop.f32.mrf.mxu0
      %v414 = vpop.f32.mrf.mxu0
      %v415 = vadd.f32 %v223, %v414
      %v416 = vpop.f32.mrf.mxu0
      %417 = vmatprep.mubr.bf16.mxu0 %v256
      %418 = vmatmul.mubr.bf16.gmra.mxu0 %v255
      %v419 = vpop.f32.mrf.mxu0
      %v420 = vadd.f32 %v223, %v419
      %v421 = vpop.f32.mrf.mxu0
      %v422 = vpop.f32.mrf.mxu0
      %v423 = vadd.f32 %v223, %v422
      %v424 = vpop.f32.mrf.mxu0
      %425 = vdwg.mxu0
      %v426 = vmax.f32 %v396, 0.0
      %v427 = vmax.f32 %v399, 0.0
      %v428 = vmax.f32 %v404, 0.0
      %v429 = vmax.f32 %v407, 0.0
      %v430 = vmax.f32 %v412, 0.0
      %v431 = vmax.f32 %v415, 0.0
      %v432 = vmax.f32 %v420, 0.0
      %v433 = vmax.f32 %v423, 0.0
      %v434 = vpack.c.bf16 %v427, %v426
      %v435 = vpack.c.bf16 %v429, %v428
      %v436 = vpack.c.bf16 %v431, %v430
      %v437 = vpack.c.bf16 %v433, %v432
      %v442 = vunpack.c.l.b16 %v434
      %v443 = vunpack.c.h.b16 %v434
      %v444 = vunpack.c.l.b16 %v435
      %v445 = vunpack.c.h.b16 %v435
      %v446 = vunpack.c.l.b16 %v436
      %v447 = vunpack.c.h.b16 %v436
      %v448 = vunpack.c.l.b16 %v437
      %v449 = vunpack.c.h.b16 %v437
      %v450 = vpack.c.b16 %v442, %v442
      %v451 = vpack.c.b16 %v443, %v443
      %v452 = vpack.c.b16 %v444, %v444
      %v453 = vpack.c.b16 %v445, %v445
      %v454 = vpack.c.b16 %v446, %v446
      %v455 = vpack.c.b16 %v447, %v447
      %v456 = vpack.c.b16 %v448, %v448
      %v457 = vpack.c.b16 %v449, %v449
      %vm466 = vcmask 257024
      %467 = vst.msk [vmem:[%s175] sm:$0xf] %vm466, %v450
      %468 = vst.msk [vmem:[%s175 + $0x4] sm:$0xf] %vm466, %v451
      %469 = vst.msk [vmem:[%s175 + $0x8] sm:$0xf] %vm466, %v452
      %470 = vst.msk [vmem:[%s175 + $0xc] sm:$0xf] %vm466, %v453
      %471 = vst.msk [vmem:[%s175 + $0x10] sm:$0xf] %vm466, %v454
      %472 = vst.msk [vmem:[%s175 + $0x14] sm:$0xf] %vm466, %v455
      %473 = vst.msk [vmem:[%s175 + $0x18] sm:$0xf] %vm466, %v456
      %474 = vst.msk [vmem:[%s175 + $0x1c] sm:$0xf] %vm466, %v457
      %s475 = smul.u32 8, %s14
      %p476 = scmp.lt.s32.totalorder %s475, 15
      %s477 = scalar_select %p476, %s475, 15
      %s478 = smul.addr %s477, 4
      %s479 = scalar_lea.vmem %s3, %s478
      // Predicated region
      $region33: #{dueling_dqn_forward.4} parent=31 // pred_check
        %p480 = pneg %p100
      $region34: #{dueling_dqn_forward.4} parent=31 // pred_check_branch
        %482 = sbr.rel (%p480) target = $region36
      $region35: #{dueling_dqn_forward.4} parent=31 // pred_region
        %s483 = smul.u32 8, %s14
      $region36: #{dueling_dqn_forward.4} parent=31 // pred_fallthru
        _
    $region32: #{dueling_dqn_forward.4} parent=5 // pred_fallthru
      _
    %p484 = scmp.le.s32.totalorder 2, %s9
    // Predicated region
    $region37: #{dueling_dqn_forward.4} parent=5 // pred_check
      %p485 = pneg %p484
    $region38: #{dueling_dqn_forward.4} parent=5 // pred_check_branch
      %487 = sbr.rel (%p485) target = $region40
    $region39: #{dueling_dqn_forward.4} parent=5 // pred_region
      %s488 = ssub.s32 %s9, 2
      // Predicated region
      $region41: #{dueling_dqn_forward.4} parent=39 // pred_check
        %p489 = pneg %p106
      $region42: #{dueling_dqn_forward.4} parent=39 // pred_check_branch
        %491 = sbr.rel (%p489) target = $region44
      $region43: #{dueling_dqn_forward.4} parent=39 // pred_region
        %s492 = smul.u32 8, %s15
        %p493 = scmp.lt.s32.totalorder %s492, 15
        %s494 = scalar_select %p493, %s492, 15
        %s495 = smul.addr %s494, 4
        %s496 = scalar_lea.vmem %s3, %s495
      $region44: #{dueling_dqn_forward.4} parent=39 // pred_fallthru
        _
    $region40: #{dueling_dqn_forward.4} parent=5 // pred_fallthru
      _
  $region6: #{dueling_dqn_forward.4} parent=0 // loop_footer
    %s13 = sadd.s32 1, %s9
  $region7: #{dueling_dqn_forward.4} parent=0 // loop_footer_branch
    %8 = sbr.rel target = $region3
  $region8: #{dueling_dqn_forward.4} parent=0 // loop_exit
    _

// kernel: dueling_dqn_forward.5
$region0: #{dueling_dqn_forward.5}
  #allocation0 [shape = 'u32[]', space=smem, size = 0x4, offset = 0x4, fixed_abs, tag = 'smem constant byte address 0x4 - core index']
  #allocation1 [shape = 'u32[144,128]{1,0:T(1,128)}', space=vmem, size = 0x12000, scoped, tag = 'internal scratch']
  %s0 = inlined_call_operand.vmem [shape: bf16[18,512], index: 0, kind: input, shape index: {}]
  %s1 = inlined_call_operand.vmem [shape: bf16[512,64], index: 1, kind: input, shape index: {}]
  %s2 = inlined_call_operand.vmem [shape: f32[1,64], index: 2, kind: input, shape index: {}]
  %s3 = inlined_call_operand.vmem [shape: bf16[18,64], index: 3, kind: output, shape index: {}]
  %s4 = sld [smem:[#allocation0]]
  $region89: #{dueling_dqn_forward.5} parent=0
    _
  %s6 = ssub.s32 1, %s4
  %s7 = scalar_select 0, %s6, %s4
  $region1: #{dueling_dqn_forward.5} parent=0
    #allocation2 [shape = 'u8[8192]{0}', space=vmem, size = 0x2000, scoped, tag = 'output window, operand 0']
    loop: start=0, step=1, limit=4
    $region2: #{dueling_dqn_forward.5} parent=1 // loop_pre_header
      _
    $region3: #{dueling_dqn_forward.5} parent=1 // loop_header
      %s9 = sphi 0, %s13
      %p10 = scmp.ge.s32.totalorder %s9, 4
      %s19 = sphi 0, %s21
      %s22 = sphi 0, %s19
      %s23 = sphi 0, %s22
      %s39 = sphi 0, %s23
      %s43 = sphi 0, %s43
      %s45 = sphi 0, %s43
      %s46 = sphi 0, %s45
      %s60 = sphi 0, %s46
      %s64 = sphi 0, %s64
      %s66 = sphi 0, %s64
      %s67 = sphi 0, %s66
      %s81 = sphi 0, %s67
      %s87 = sphi 0, %s89
      %s90 = sphi 0, %s87
      %s91 = sphi 0, %s90
      %s107 = sphi 0, %s91
    $region4: #{dueling_dqn_forward.5} parent=1 // loop_header_branch
      %12 = sbr.rel (%p10) target = $region8
    $region5: #{dueling_dqn_forward.5} parent=1 // loop_body
      %s14 = ssub.s32 %s9, 1
      %s15 = ssub.s32 %s9, 2
      %s16 = sadd.s32 %s9, 1
      %s17 = ssub.s32 %s9, %s16
      %p18 = scmp.eq.s32.totalorder %s17, 0
      %s20 = sadd.s32 %s19, 1
      %s21 = scalar_select %p18, %s19, %s20
      %p24 = pneg %p18
      %p25 = scmp.eq.s32.totalorder %s9, 1
      %p26 = por %p24, %p25
      %p27 = scmp.ne.s32.totalorder %s19, %s22
      %p28 = scmp.eq.s32.totalorder %s9, 0
      %p29 = por %p27, %p28
      %p30 = scmp.ne.s32.totalorder %s19, %s22
      %p31 = scmp.eq.s32.totalorder %s14, 1
      %p32 = por %p30, %p31
      %p33 = scmp.ne.s32.totalorder %s22, %s23
      %p34 = scmp.eq.s32.totalorder %s14, 0
      %p35 = por %p33, %p34
      %p36 = scmp.ne.s32.totalorder %s22, %s23
      %p37 = scmp.eq.s32.totalorder %s15, 1
      %p38 = por %p36, %p37
      %p40 = scmp.ne.s32.totalorder %s23, %s39
      %p41 = scmp.eq.s32.totalorder %s15, 0
      %p42 = por %p40, %p41
      %s44 = sadd.s32 %s43, 1
      %p47 = scmp.eq.s32.totalorder %s9, 1
      %p48 = scmp.ne.s32.totalorder %s43, %s45
      %p49 = scmp.eq.s32.totalorder %s9, 0
      %p50 = por %p48, %p49
      %p51 = scmp.ne.s32.totalorder %s43, %s45
      %p52 = scmp.eq.s32.totalorder %s14, 1
      %p53 = por %p51, %p52
      %p54 = scmp.ne.s32.totalorder %s45, %s46
      %p55 = scmp.eq.s32.totalorder %s14, 0
      %p56 = por %p54, %p55
      %p57 = scmp.ne.s32.totalorder %s45, %s46
      %p58 = scmp.eq.s32.totalorder %s15, 1
      %p59 = por %p57, %p58
      %p61 = scmp.ne.s32.totalorder %s46, %s60
      %p62 = scmp.eq.s32.totalorder %s15, 0
      %p63 = por %p61, %p62
      %s65 = sadd.s32 %s64, 1
      %p68 = scmp.eq.s32.totalorder %s9, 1
      %p69 = scmp.ne.s32.totalorder %s64, %s66
      %p70 = scmp.eq.s32.totalorder %s9, 0
      %p71 = por %p69, %p70
      %p72 = scmp.ne.s32.totalorder %s64, %s66
      %p73 = scmp.eq.s32.totalorder %s14, 1
      %p74 = por %p72, %p73
      %p75 = scmp.ne.s32.totalorder %s66, %s67
      %p76 = scmp.eq.s32.totalorder %s14, 0
      %p77 = por %p75, %p76
      %p78 = scmp.ne.s32.totalorder %s66, %s67
      %p79 = scmp.eq.s32.totalorder %s15, 1
      %p80 = por %p78, %p79
      %p82 = scmp.ne.s32.totalorder %s67, %s81
      %p83 = scmp.eq.s32.totalorder %s15, 0
      %p84 = por %p82, %p83
      %s85 = ssub.s32 %s9, %s16
      %p86 = scmp.eq.s32.totalorder %s85, 0
      %s88 = sadd.s32 %s87, 1
      %s89 = scalar_select %p86, %s87, %s88
      %p92 = pneg %p86
      %p93 = scmp.eq.s32.totalorder %s9, 1
      %p94 = por %p92, %p93
      %p95 = scmp.ne.s32.totalorder %s87, %s90
      %p96 = scmp.eq.s32.totalorder %s9, 0
      %p97 = por %p95, %p96
      %p98 = scmp.ne.s32.totalorder %s87, %s90
      %p99 = scmp.eq.s32.totalorder %s14, 1
      %p100 = por %p98, %p99
      %p101 = scmp.ne.s32.totalorder %s90, %s91
      %p102 = scmp.eq.s32.totalorder %s14, 0
      %p103 = por %p101, %p102
      %p104 = scmp.ne.s32.totalorder %s90, %s91
      %p105 = scmp.eq.s32.totalorder %s15, 1
      %p106 = por %p104, %p105
      %p108 = scmp.ne.s32.totalorder %s91, %s107
      %p109 = scmp.eq.s32.totalorder %s15, 0
      %p110 = por %p108, %p109
      %p111 = scmp.le.s32.totalorder 1, %s9
      %p112 = scmp.lt.s32.totalorder %s9, 3
      %p113 = pnand %p111, %p112
      %p114 = pneg %p113
      // Predicated region
      $region9: #{dueling_dqn_forward.5} parent=5 // pred_check
        _
      $region10: #{dueling_dqn_forward.5} parent=5 // pred_check_branch
        %116 = sbr.rel (%p113) target = $region12
      $region11: #{dueling_dqn_forward.5} parent=5 // pred_region
        %s117 = ssub.s32 %s9, 1
        // Predicated region
        $region13: #{dueling_dqn_forward.5} parent=11 // pred_check
          %p118 = pneg %p56
        $region14: #{dueling_dqn_forward.5} parent=11 // pred_check_branch
          %120 = sbr.rel (%p118) target = $region16
        $region15: #{dueling_dqn_forward.5} parent=11 // pred_region
          _
        $region16: #{dueling_dqn_forward.5} parent=11 // pred_fallthru
          _
        // Predicated region
        $region17: #{dueling_dqn_forward.5} parent=11 // pred_check
          %p121 = pneg %p77
        $region18: #{dueling_dqn_forward.5} parent=11 // pred_check_branch
          %123 = sbr.rel (%p121) target = $region20
        $region19: #{dueling_dqn_forward.5} parent=11 // pred_region
          _
        $region20: #{dueling_dqn_forward.5} parent=11 // pred_fallthru
          _
      $region12: #{dueling_dqn_forward.5} parent=5 // pred_fallthru
        _
      %p124 = scmp.lt.s32.totalorder %s9, 2
      // Predicated region
      $region21: #{dueling_dqn_forward.5} parent=5 // pred_check
        %p125 = pneg %p124
      $region22: #{dueling_dqn_forward.5} parent=5 // pred_check_branch
        %127 = sbr.rel (%p125) target = $region24
      $region23: #{dueling_dqn_forward.5} parent=5 // pred_region
        // Predicated region
        $region25: #{dueling_dqn_forward.5} parent=23 // pred_check
          %p128 = pneg %p29
        $region26: #{dueling_dqn_forward.5} parent=23 // pred_check_branch
          %130 = sbr.rel (%p128) target = $region28
        $region27: #{dueling_dqn_forward.5} parent=23 // pred_region
          %s131 = smul.u32 2, %s9
          %s132 = ssub.s32 3, %s131
          %p133 = scmp.lt.s32.totalorder %s132, 2
          %s134 = scalar_select %p133, %s132, 2
          %s135 = smul.u32 64, %s134
          %s136 = smul.u32 %s135, 4
          %p137 = scmp.lt.s32.totalorder %s131, 2
          %s138 = scalar_select %p137, %s131, 2
          %s139 = smul.addr %s138, 4
          %s140 = smul.addr %s139, 4
          %s141 = scalar_lea.vmem %s0, %s140
          %s142 = smul.u32 2, %s9
          %s143 = ssub.s32 3, %s142
          %p144 = scmp.lt.s32.totalorder %s143, 2
          %s145 = scalar_select %p144, %s143, 2
          %s146 = smul.u32 64, %s145
          %s147 = smul.u32 %s146, 4
        $region28: #{dueling_dqn_forward.5} parent=23 // pred_fallthru
          _
      $region24: #{dueling_dqn_forward.5} parent=5 // pred_fallthru
        _
      %p148 = scmp.le.s32.totalorder 1, %s9
      %p149 = scmp.lt.s32.totalorder %s9, 3
      %p150 = pnand %p148, %p149
      %p151 = pneg %p150
      // Predicated region
      $region29: #{dueling_dqn_forward.5} parent=5 // pred_check
        _
      $region30: #{dueling_dqn_forward.5} parent=5 // pred_check_branch
        %153 = sbr.rel (%p150) target = $region32
      $region31: #{dueling_dqn_forward.5} parent=5 // pred_region
        %s154 = ssub.s32 %s9, 1
        %s155 = smul.u32 2, %s14
        %s156 = ssub.s32 3, %s155
        %p157 = scmp.lt.s32.totalorder %s156, 2
        %s158 = scalar_select %p157, %s156, 2
        %s159 = smul.u32 64, %s158
        %s160 = smul.u32 %s159, 4
        %p161 = scmp.lt.s32.totalorder %s155, 2
        %s162 = scalar_select %p161, %s155, 2
        %s163 = smul.addr %s162, 4
        %s164 = smul.addr %s163, 4
        %s165 = scalar_lea.vmem %s0, %s164
        %p166 = pneg %p35
        %p167 = pneg %p32
        %p168 = pneg %p56
        %p169 = pneg %p53
        %p170 = pneg %p77
        %p171 = pneg %p74
        %p172 = pneg %p103
        %p173 = pneg %p100
        %s174 = sand.u32 %s90, 1
        %s175 = sand.u32 %s90, 1
        %s176 = smul.addr %s175, 8
        %s177 = scalar_lea.vmem [#allocation2], %s176
        %s178 = smul.u32 2, %s14
        %s179 = ssub.s32 3, %s178
        %p180 = scmp.lt.s32.totalorder %s179, 2
        %s181 = scalar_select %p180, %s179, 2
        %s182 = smul.u32 64, %s181
        %s183 = smul.u32 %s182, 4
        %p184 = scmp.lt.s32.totalorder %s178, 2
        %s185 = scalar_select %p184, %s178, 2
        %s186 = smul.addr %s185, 4
        %s187 = smul.addr %s186, 4
        %s188 = scalar_lea.vmem %s0, %s187
        %s189 = smul.u32 2, %s14
        %s190 = ssub.s32 3, %s189
        %p191 = scmp.lt.s32.totalorder %s190, 2
        %s192 = scalar_select %p191, %s190, 2
        %s193 = smul.u32 64, %s192
        %s194 = smul.u32 %s193, 4
        %s195 = smul.u32 2, %s14
        %s196 = ssub.s32 3, %s195
        %p197 = scmp.lt.s32.totalorder %s196, 2
        %s198 = scalar_select %p197, %s196, 2
        %s199 = smul.u32 64, %s198
        %v201 = vld [vmem:[%s188] sm:$0xff]
        %v202 = vld [vmem:[%s188 + $0x8] sm:$0xff]
        %v203 = vld [vmem:[%s188 + $0x10] sm:$0xff]
        %v204 = vld [vmem:[%s188 + $0x18] sm:$0xff]
        %v205 = vld [vmem:[%s1] sm:$0xf]
        %v206 = vld [vmem:[%s1 + $0x4] sm:$0xf]
        %v207 = vld [vmem:[%s1 + $0x8] sm:$0xf]
        %v208 = vld [vmem:[%s1 + $0xc] sm:$0xf]
        %v209 = vld [vmem:[%s1 + $0x10] sm:$0xf]
        %v210 = vld [vmem:[%s1 + $0x14] sm:$0xf]
        %v211 = vld [vmem:[%s1 + $0x18] sm:$0xf]
        %v212 = vld [vmem:[%s1 + $0x1c] sm:$0xf]
        %v213 = vld [vmem:[%s1 + $0x20] sm:$0xf]
        %v214 = vld [vmem:[%s1 + $0x24] sm:$0xf]
        %v215 = vld [vmem:[%s1 + $0x28] sm:$0xf]
        %v216 = vld [vmem:[%s1 + $0x2c] sm:$0xf]
        %v217 = vld [vmem:[%s1 + $0x30] sm:$0xf]
        %v218 = vld [vmem:[%s1 + $0x34] sm:$0xf]
        %v219 = vld [vmem:[%s1 + $0x38] sm:$0xf]
        %v220 = vld [vmem:[%s1 + $0x3c] sm:$0xf]
        %v221 = vld [vmem:[%s1 + $0x40] sm:$0xf]
        %v222 = vld [vmem:[%s1 + $0x44] sm:$0xf]
        %v223 = vld [vmem:[%s1 + $0x48] sm:$0xf]
        %v224 = vld [vmem:[%s1 + $0x4c] sm:$0xf]
        %v225 = vld [vmem:[%s1 + $0x50] sm:$0xf]
        %v226 = vld [vmem:[%s1 + $0x54] sm:$0xf]
        %v227 = vld [vmem:[%s1 + $0x58] sm:$0xf]
        %v228 = vld [vmem:[%s1 + $0x5c] sm:$0xf]
        %v229 = vld [vmem:[%s1 + $0x60] sm:$0xf]
        %v230 = vld [vmem:[%s1 + $0x64] sm:$0xf]
        %v231 = vld [vmem:[%s1 + $0x68] sm:$0xf]
        %v232 = vld [vmem:[%s1 + $0x6c] sm:$0xf]
        %v233 = vld [vmem:[%s1 + $0x70] sm:$0xf]
        %v234 = vld [vmem:[%s1 + $0x74] sm:$0xf]
        %v235 = vld [vmem:[%s1 + $0x78] sm:$0xf]
        %v236 = vld [vmem:[%s1 + $0x7c] sm:$0xf]
        %v237 = vld [vmem:[%s1 + $0x80] sm:$0xf]
        %v238 = vld [vmem:[%s1 + $0x84] sm:$0xf]
        %v239 = vld [vmem:[%s1 + $0x88] sm:$0xf]
        %v240 = vld [vmem:[%s1 + $0x8c] sm:$0xf]
        %v241 = vld [vmem:[%s1 + $0x90] sm:$0xf]
        %v242 = vld [vmem:[%s1 + $0x94] sm:$0xf]
        %v243 = vld [vmem:[%s1 + $0x98] sm:$0xf]
        %v244 = vld [vmem:[%s1 + $0x9c] sm:$0xf]
        %v245 = vld [vmem:[%s1 + $0xa0] sm:$0xf]
        %v246 = vld [vmem:[%s1 + $0xa4] sm:$0xf]
        %v247 = vld [vmem:[%s1 + $0xa8] sm:$0xf]
        %v248 = vld [vmem:[%s1 + $0xac] sm:$0xf]
        %v249 = vld [vmem:[%s1 + $0xb0] sm:$0xf]
        %v250 = vld [vmem:[%s1 + $0xb4] sm:$0xf]
        %v251 = vld [vmem:[%s1 + $0xb8] sm:$0xf]
        %v252 = vld [vmem:[%s1 + $0xbc] sm:$0xf]
        %v253 = vld [vmem:[%s1 + $0xc0] sm:$0xf]
        %v254 = vld [vmem:[%s1 + $0xc4] sm:$0xf]
        %v255 = vld [vmem:[%s1 + $0xc8] sm:$0xf]
        %v256 = vld [vmem:[%s1 + $0xcc] sm:$0xf]
        %v257 = vld [vmem:[%s1 + $0xd0] sm:$0xf]
        %v258 = vld [vmem:[%s1 + $0xd4] sm:$0xf]
        %v259 = vld [vmem:[%s1 + $0xd8] sm:$0xf]
        %v260 = vld [vmem:[%s1 + $0xdc] sm:$0xf]
        %v261 = vld [vmem:[%s1 + $0xe0] sm:$0xf]
        %v262 = vld [vmem:[%s1 + $0xe4] sm:$0xf]
        %v263 = vld [vmem:[%s1 + $0xe8] sm:$0xf]
        %v264 = vld [vmem:[%s1 + $0xec] sm:$0xf]
        %v265 = vld [vmem:[%s1 + $0xf0] sm:$0xf]
        %v266 = vld [vmem:[%s1 + $0xf4] sm:$0xf]
        %v267 = vld [vmem:[%s1 + $0xf8] sm:$0xf]
        %v268 = vld [vmem:[%s1 + $0xfc] sm:$0xf]
        %v269 = vld [vmem:[%s2] sm:$0x1]
        %v271 = vlaneseq
        %v272 = vshrl.u32 %v271, 7
        %v273 = vsub.s32 0, %v272
        %v274 = vrot.slane %v269, %v273
        %v280 = vunpack.c.l.b16 %v201
        %v281 = vunpack.c.h.b16 %v201
        %v282 = vunpack.c.l.b16 %v202
        %v283 = vunpack.c.h.b16 %v202
        %v284 = vunpack.c.l.b16 %v203
        %v285 = vunpack.c.h.b16 %v203
        %v286 = vunpack.c.l.b16 %v204
        %v287 = vunpack.c.h.b16 %v204
        %v288 = vpack.c.b16 %v284, %v280
        %v289 = vpack.c.b16 %v285, %v281
        %v290 = vpack.c.b16 %v286, %v282
        %v291 = vpack.c.b16 %v287, %v283
        %v360 = vunpack.c.l.b16 %v205
        %v361 = vunpack.c.l.b16 %v206
        %v362 = vunpack.c.l.b16 %v207
        %v363 = vunpack.c.l.b16 %v208
        %v364 = vunpack.c.l.b16 %v209
        %v365 = vunpack.c.l.b16 %v210
        %v366 = vunpack.c.l.b16 %v211
        %v367 = vunpack.c.l.b16 %v212
        %v368 = vunpack.c.l.b16 %v213
        %v369 = vunpack.c.l.b16 %v214
        %v370 = vunpack.c.l.b16 %v215
        %v371 = vunpack.c.l.b16 %v216
        %v372 = vunpack.c.l.b16 %v217
        %v373 = vunpack.c.l.b16 %v218
        %v374 = vunpack.c.l.b16 %v219
        %v375 = vunpack.c.l.b16 %v220
        %v376 = vunpack.c.l.b16 %v221
        %v377 = vunpack.c.l.b16 %v222
        %v378 = vunpack.c.l.b16 %v223
        %v379 = vunpack.c.l.b16 %v224
        %v380 = vunpack.c.l.b16 %v225
        %v381 = vunpack.c.l.b16 %v226
        %v382 = vunpack.c.l.b16 %v227
        %v383 = vunpack.c.l.b16 %v228
        %v384 = vunpack.c.l.b16 %v229
        %v385 = vunpack.c.l.b16 %v230
        %v386 = vunpack.c.l.b16 %v231
        %v387 = vunpack.c.l.b16 %v232
        %v388 = vunpack.c.l.b16 %v233
        %v389 = vunpack.c.l.b16 %v234
        %v390 = vunpack.c.l.b16 %v235
        %v391 = vunpack.c.l.b16 %v236
        %v392 = vunpack.c.l.b16 %v237
        %v393 = vunpack.c.l.b16 %v238
        %v394 = vunpack.c.l.b16 %v239
        %v395 = vunpack.c.l.b16 %v240
        %v396 = vunpack.c.l.b16 %v241
        %v397 = vunpack.c.l.b16 %v242
        %v398 = vunpack.c.l.b16 %v243
        %v399 = vunpack.c.l.b16 %v244
        %v400 = vunpack.c.l.b16 %v245
        %v401 = vunpack.c.l.b16 %v246
        %v402 = vunpack.c.l.b16 %v247
        %v403 = vunpack.c.l.b16 %v248
        %v404 = vunpack.c.l.b16 %v249
        %v405 = vunpack.c.l.b16 %v250
        %v406 = vunpack.c.l.b16 %v251
        %v407 = vunpack.c.l.b16 %v252
        %v408 = vunpack.c.l.b16 %v253
        %v409 = vunpack.c.l.b16 %v254
        %v410 = vunpack.c.l.b16 %v255
        %v411 = vunpack.c.l.b16 %v256
        %v412 = vunpack.c.l.b16 %v257
        %v413 = vunpack.c.l.b16 %v258
        %v414 = vunpack.c.l.b16 %v259
        %v415 = vunpack.c.l.b16 %v260
        %v416 = vunpack.c.l.b16 %v261
        %v417 = vunpack.c.l.b16 %v262
        %v418 = vunpack.c.l.b16 %v263
        %v419 = vunpack.c.l.b16 %v264
        %v420 = vunpack.c.l.b16 %v265
        %v421 = vunpack.c.l.b16 %v266
        %v422 = vunpack.c.l.b16 %v267
        %v423 = vunpack.c.l.b16 %v268
        %v424 = vpack.c.b16 %v361, %v360
        %v425 = vpack.c.b16 %v363, %v362
        %v426 = vpack.c.b16 %v365, %v364
        %v427 = vpack.c.b16 %v367, %v366
        %v428 = vpack.c.b16 %v369, %v368
        %v429 = vpack.c.b16 %v371, %v370
        %v430 = vpack.c.b16 %v373, %v372
        %v431 = vpack.c.b16 %v375, %v374
        %v432 = vpack.c.b16 %v377, %v376
        %v433 = vpack.c.b16 %v379, %v378
        %v434 = vpack.c.b16 %v381, %v380
        %v435 = vpack.c.b16 %v383, %v382
        %v436 = vpack.c.b16 %v385, %v384
        %v437 = vpack.c.b16 %v387, %v386
        %v438 = vpack.c.b16 %v389, %v388
        %v439 = vpack.c.b16 %v391, %v390
        %v440 = vpack.c.b16 %v393, %v392
        %v441 = vpack.c.b16 %v395, %v394
        %v442 = vpack.c.b16 %v397, %v396
        %v443 = vpack.c.b16 %v399, %v398
        %v444 = vpack.c.b16 %v401, %v400
        %v445 = vpack.c.b16 %v403, %v402
        %v446 = vpack.c.b16 %v405, %v404
        %v447 = vpack.c.b16 %v407, %v406
        %v448 = vpack.c.b16 %v409, %v408
        %v449 = vpack.c.b16 %v411, %v410
        %v450 = vpack.c.b16 %v413, %v412
        %v451 = vpack.c.b16 %v415, %v414
        %v452 = vpack.c.b16 %v417, %v416
        %v453 = vpack.c.b16 %v419, %v418
        %v454 = vpack.c.b16 %v421, %v420
        %v455 = vpack.c.b16 %v423, %v422
        %488 = vmatprep.subr.bf16.mxu0 0
        %489 = vmatpush1.bf16.msra.mxu0 %v431
        %490 = vmatprep.subr.bf16.mxu0 0
        %491 = vmatpush1.bf16.msra.mxu0 %v430
        %492 = vmatprep.subr.bf16.mxu0 0
        %493 = vmatpush1.bf16.msra.mxu0 %v429
        %494 = vmatprep.subr.bf16.mxu0 0
        %495 = vmatpush1.bf16.msra.mxu0 %v428
        %496 = vmatprep.subr.bf16.mxu0 0
        %497 = vmatpush1.bf16.msra.mxu0 %v427
        %498 = vmatprep.subr.bf16.mxu0 0
        %499 = vmatpush1.bf16.msra.mxu0 %v426
        %500 = vmatprep.subr.bf16.mxu0 0
        %501 = vmatpush1.bf16.msra.mxu0 %v425
        %502 = vmatprep.subr.bf16.mxu0 0
        %503 = vmatpush1.bf16.msra.mxu0 %v424
        %504 = vmatprep.subr.bf16.mxu0 0
        %505 = vmatpush2.bf16.msra.mxu0 %v439
        %506 = vmatprep.subr.bf16.mxu0 0
        %507 = vmatpush2.bf16.msra.mxu0 %v438
        %508 = vmatprep.subr.bf16.mxu0 0
        %509 = vmatpush2.bf16.msra.mxu0 %v437
        %510 = vmatprep.subr.bf16.mxu0 0
        %511 = vmatpush2.bf16.msra.mxu0 %v436
        %512 = vmatprep.subr.bf16.mxu0 0
        %513 = vmatpush2.bf16.msra.mxu0 %v435
        %514 = vmatprep.subr.bf16.mxu0 0
        %515 = vmatpush2.bf16.msra.mxu0 %v434
        %516 = vmatprep.subr.bf16.mxu0 0
        %517 = vmatpush2.bf16.msra.mxu0 %v433
        %518 = vmatprep.subr.bf16.mxu0 0
        %519 = vmatpush2.bf16.msra.mxu0 %v432
        %520 = vmatprep.mubr.bf16.mxu0 %v289
        %521 = vmatmul.mubr.bf16.gmra.mxu0 %v288
        %v522 = vpop.f32.mrf.mxu0
        %v523 = vadd.f32 %v274, %v522
        %v524 = vpop.f32.mrf.mxu0
        %v525 = vpop.f32.mrf.mxu0
        %v526 = vadd.f32 %v274, %v525
        %v527 = vpop.f32.mrf.mxu0
        %528 = vdwg.mxu0
        %529 = vmatprep.subr.bf16.mxu0 0
        %530 = vmatpush1.bf16.msra.mxu0 %v447
        %531 = vmatprep.subr.bf16.mxu0 0
        %532 = vmatpush1.bf16.msra.mxu0 %v446
        %533 = vmatprep.subr.bf16.mxu0 0
        %534 = vmatpush1.bf16.msra.mxu0 %v445
        %535 = vmatprep.subr.bf16.mxu0 0
        %536 = vmatpush1.bf16.msra.mxu0 %v444
        %537 = vmatprep.subr.bf16.mxu0 0
        %538 = vmatpush1.bf16.msra.mxu0 %v443
        %539 = vmatprep.subr.bf16.mxu0 0
        %540 = vmatpush1.bf16.msra.mxu0 %v442
        %541 = vmatprep.subr.bf16.mxu0 0
        %542 = vmatpush1.bf16.msra.mxu0 %v441
        %543 = vmatprep.subr.bf16.mxu0 0
        %544 = vmatpush1.bf16.msra.mxu0 %v440
        %545 = vmatprep.subr.bf16.mxu0 0
        %546 = vmatpush2.bf16.msra.mxu0 %v455
        %547 = vmatprep.subr.bf16.mxu0 0
        %548 = vmatpush2.bf16.msra.mxu0 %v454
        %549 = vmatprep.subr.bf16.mxu0 0
        %550 = vmatpush2.bf16.msra.mxu0 %v453
        %551 = vmatprep.subr.bf16.mxu0 0
        %552 = vmatpush2.bf16.msra.mxu0 %v452
        %553 = vmatprep.subr.bf16.mxu0 0
        %554 = vmatpush2.bf16.msra.mxu0 %v451
        %555 = vmatprep.subr.bf16.mxu0 0
        %556 = vmatpush2.bf16.msra.mxu0 %v450
        %557 = vmatprep.subr.bf16.mxu0 0
        %558 = vmatpush2.bf16.msra.mxu0 %v449
        %559 = vmatprep.subr.bf16.mxu0 0
        %560 = vmatpush2.bf16.msra.mxu0 %v448
        %561 = vmatprep.mubr.bf16.mxu0 %v291
        %562 = vmatmul.mubr.bf16.gmra.mxu0 %v290
        %v563 = vpop.f32.mrf.mxu0
        %v564 = vadd.f32 %v523, %v563
        %v565 = vpop.f32.mrf.mxu0
        %v566 = vpop.f32.mrf.mxu0
        %v567 = vadd.f32 %v526, %v566
        %v568 = vpop.f32.mrf.mxu0
        %569 = vdwg.mxu0
        %v570 = vmax.f32 %v564, 0.0
        %v571 = vmax.f32 %v567, 0.0
        %v572 = vpack.c.bf16 %v571, %v570
        %v574 = vunpack.c.l.b16 %v572
        %v575 = vunpack.c.h.b16 %v572
        %v576 = vpack.c.b16 %v574, %v574
        %v577 = vpack.c.b16 %v575, %v575
        %vm580 = vcmask 519168
        %581 = vst.msk [vmem:[%s177] sm:$0xf] %vm580, %v576
        %582 = vst.msk [vmem:[%s177 + $0x4] sm:$0xf] %vm580, %v577
        %s583 = sand.u32 %s90, 1
        %s584 = sand.u32 %s90, 1
        %s585 = smul.addr %s584, 8
        %s586 = scalar_lea.vmem [#allocation2], %s585
        // Predicated region
        $region33: #{dueling_dqn_forward.5} parent=31 // pred_check
          %p587 = pneg %p100
        $region34: #{dueling_dqn_forward.5} parent=31 // pred_check_branch
          %589 = sbr.rel (%p587) target = $region36
        $region35: #{dueling_dqn_forward.5} parent=31 // pred_region
          %s590 = smul.u32 2, %s14
          %s591 = ssub.s32 3, %s590
          %p592 = scmp.lt.s32.totalorder %s591, 2
          %s593 = scalar_select %p592, %s591, 2
          %s594 = smul.u32 64, %s593
          %p595 = scmp.ne.s32.totalorder 0, %s594
          %s596 = smul.addr %s590, 4
          %s597 = scalar_lea.vmem %s3, %s596
          // Predicated region
          $region37: #{dueling_dqn_forward.5} parent=35 // pred_check
            %p598 = pneg %p595
          $region38: #{dueling_dqn_forward.5} parent=35 // pred_check_branch
            %600 = sbr.rel (%p598) target = $region40
          $region39: #{dueling_dqn_forward.5} parent=35 // pred_region
            // Predicated region
            $region41: #{dueling_dqn_forward.5} parent=39 // pred_check
              _
            $region42: #{dueling_dqn_forward.5} parent=39 // pred_check_branch
              %602 = sbr.rel target = $region44
            $region43: #{dueling_dqn_forward.5} parent=39 // pred_region
              // Predicated region
              $region63: #{dueling_dqn_forward.5} parent=43 // pred_check
                _
              $region64: #{dueling_dqn_forward.5} parent=43 // pred_check_branch
                %654 = sbr.rel (0) target = $region66
              $region65: #{dueling_dqn_forward.5} parent=43 // pred_region
                %s656 = ssub.s32 16, 1
                %s657 = sshrl.u32 %s593, 1
                // While loop
                $region67: #{dueling_dqn_forward.5} parent=65 // loop_pre_header
                  _
                $region68: #{dueling_dqn_forward.5} parent=65 // loop_header
                  %s659 = sphi 0, %s661
                  %p660 = scmp.ge.s32.totalorder %s659, %s657
                  %s664 = sphi 0, %s673
                  %s665 = sphi %s586, %s676
                  %s666 = sphi %s597, %s677
                $region69: #{dueling_dqn_forward.5} parent=65 // loop_header_branch
                  %663 = sbr.rel (%p660) target = $region73
                $region70: #{dueling_dqn_forward.5} parent=65 // loop_body
                  %v667 = vld [vmem:[%s665] sm:%s656]
                  %668 = vst [vmem:[%s666] sm:%s656] %v667
                  %v669 = vld [vmem:[%s665 + $0x4] sm:%s656]
                  %670 = vst [vmem:[%s666 + $0x4] sm:%s656] %v669
                  %s671 = sadd.s32 1, %s664
                  %p672 = scmp.ge.s32.totalorder %s671, %s657
                  %s673 = scalar_select %p672, 0, %s671
                  %s674 = smul.u32 %s673, 8
                  %s675 = smul.u32 %s673, 8
                  %s676 = scalar_lea.vmem %s586, %s674 [#allocation2]
                  %s677 = scalar_lea.vmem %s597, %s675
                $region71: #{dueling_dqn_forward.5} parent=65 // loop_footer
                  %s661 = sadd.s32 %s659, 1
                $region72: #{dueling_dqn_forward.5} parent=65 // loop_footer_branch
                  %658 = sbr.rel target = $region68
                $region73: #{dueling_dqn_forward.5} parent=65 // loop_exit
                  _
                %s678 = sshrl.u32 %s593, 1
                %s679 = sand.u32 %s593, 1
                %s680 = smul.u32 %s678, 2
                %s681 = smul.u32 4, %s680
                %s682 = scalar_lea.vmem %s586, %s681 [#allocation2]
                %s683 = smul.u32 4, %s680
                %s684 = scalar_lea.vmem %s597, %s683
                // While loop
                $region74: #{dueling_dqn_forward.5} parent=65 // loop_pre_header
                  _
                $region75: #{dueling_dqn_forward.5} parent=65 // loop_header
                  %s686 = sphi 0, %s688
                  %p687 = scmp.ge.s32.totalorder %s686, %s679
                  %s691 = sphi 0, %s698
                  %s692 = sphi %s682, %s701
                  %s693 = sphi %s684, %s702
                $region76: #{dueling_dqn_forward.5} parent=65 // loop_header_branch
                  %690 = sbr.rel (%p687) target = $region80
                $region77: #{dueling_dqn_forward.5} parent=65 // loop_body
                  %v694 = vld [vmem:[%s692] sm:%s656]
                  %695 = vst [vmem:[%s693] sm:%s656] %v694
                  %s696 = sadd.s32 1, %s691
                  %p697 = scmp.ge.s32.totalorder %s696, %s679
                  %s698 = scalar_select %p697, 0, %s696
                  %s699 = smul.u32 %s698, 4
                  %s700 = smul.u32 %s698, 4
                  %s701 = scalar_lea.vmem %s682, %s699 [#allocation2]
                  %s702 = scalar_lea.vmem %s684, %s700
                $region78: #{dueling_dqn_forward.5} parent=65 // loop_footer
                  %s688 = sadd.s32 %s686, 1
                $region79: #{dueling_dqn_forward.5} parent=65 // loop_footer_branch
                  %685 = sbr.rel target = $region75
                $region80: #{dueling_dqn_forward.5} parent=65 // loop_exit
                  _
              $region66: #{dueling_dqn_forward.5} parent=43 // pred_fallthru
                _
            $region44: #{dueling_dqn_forward.5} parent=39 // pred_fallthru
              _
            // Predicated region
            $region45: #{dueling_dqn_forward.5} parent=39 // pred_check
              _
            $region46: #{dueling_dqn_forward.5} parent=39 // pred_check_branch
              %604 = sbr.rel (0) target = $region48
            $region47: #{dueling_dqn_forward.5} parent=39 // pred_region
              %s606 = ssub.s32 16, 1
              %s607 = sshrl.u32 %s593, 1
              // While loop
              $region49: #{dueling_dqn_forward.5} parent=47 // loop_pre_header
                _
              $region50: #{dueling_dqn_forward.5} parent=47 // loop_header
                %s609 = sphi 0, %s611
                %p610 = scmp.ge.s32.totalorder %s609, %s607
                %s614 = sphi 0, %s623
                %s615 = sphi %s586, %s626
                %s616 = sphi %s597, %s627
              $region51: #{dueling_dqn_forward.5} parent=47 // loop_header_branch
                %613 = sbr.rel (%p610) target = $region55
              $region52: #{dueling_dqn_forward.5} parent=47 // loop_body
                %v617 = vld [vmem:[%s615] sm:%s606]
                %618 = vst [vmem:[%s616] sm:%s606] %v617
                %v619 = vld [vmem:[%s615 + $0x4] sm:%s606]
                %620 = vst [vmem:[%s616 + $0x4] sm:%s606] %v619
                %s621 = sadd.s32 1, %s614
                %p622 = scmp.ge.s32.totalorder %s621, %s607
                %s623 = scalar_select %p622, 0, %s621
                %s624 = smul.u32 %s623, 8
                %s625 = smul.u32 %s623, 8
                %s626 = scalar_lea.vmem %s586, %s624 [#allocation2]
                %s627 = scalar_lea.vmem %s597, %s625
              $region53: #{dueling_dqn_forward.5} parent=47 // loop_footer
                %s611 = sadd.s32 %s609, 1
              $region54: #{dueling_dqn_forward.5} parent=47 // loop_footer_branch
                %608 = sbr.rel target = $region50
              $region55: #{dueling_dqn_forward.5} parent=47 // loop_exit
                _
              %s628 = sshrl.u32 %s593, 1
              %s629 = sand.u32 %s593, 1
              %s630 = smul.u32 %s628, 2
              %s631 = smul.u32 4, %s630
              %s632 = scalar_lea.vmem %s586, %s631 [#allocation2]
              %s633 = smul.u32 4, %s630
              %s634 = scalar_lea.vmem %s597, %s633
              // While loop
              $region56: #{dueling_dqn_forward.5} parent=47 // loop_pre_header
                _
              $region57: #{dueling_dqn_forward.5} parent=47 // loop_header
                %s636 = sphi 0, %s638
                %p637 = scmp.ge.s32.totalorder %s636, %s629
                %s641 = sphi 0, %s648
                %s642 = sphi %s632, %s651
                %s643 = sphi %s634, %s652
              $region58: #{dueling_dqn_forward.5} parent=47 // loop_header_branch
                %640 = sbr.rel (%p637) target = $region62
              $region59: #{dueling_dqn_forward.5} parent=47 // loop_body
                %v644 = vld [vmem:[%s642] sm:%s606]
                %645 = vst [vmem:[%s643] sm:%s606] %v644
                %s646 = sadd.s32 1, %s641
                %p647 = scmp.ge.s32.totalorder %s646, %s629
                %s648 = scalar_select %p647, 0, %s646
                %s649 = smul.u32 %s648, 4
                %s650 = smul.u32 %s648, 4
                %s651 = scalar_lea.vmem %s632, %s649 [#allocation2]
                %s652 = scalar_lea.vmem %s634, %s650
              $region60: #{dueling_dqn_forward.5} parent=47 // loop_footer
                %s638 = sadd.s32 %s636, 1
              $region61: #{dueling_dqn_forward.5} parent=47 // loop_footer_branch
                %635 = sbr.rel target = $region57
              $region62: #{dueling_dqn_forward.5} parent=47 // loop_exit
                _
            $region48: #{dueling_dqn_forward.5} parent=39 // pred_fallthru
              _
          $region40: #{dueling_dqn_forward.5} parent=35 // pred_fallthru
            _
          %703 = vnop
        $region36: #{dueling_dqn_forward.5} parent=31 // pred_fallthru
          _
      $region32: #{dueling_dqn_forward.5} parent=5 // pred_fallthru
        _
      %p704 = scmp.le.s32.totalorder 2, %s9
      // Predicated region
      $region81: #{dueling_dqn_forward.5} parent=5 // pred_check
        %p705 = pneg %p704
      $region82: #{dueling_dqn_forward.5} parent=5 // pred_check_branch
        %707 = sbr.rel (%p705) target = $region84
      $region83: #{dueling_dqn_forward.5} parent=5 // pred_region
        %s708 = ssub.s32 %s9, 2
        // Predicated region
        $region85: #{dueling_dqn_forward.5} parent=83 // pred_check
          %p709 = pneg %p106
        $region86: #{dueling_dqn_forward.5} parent=83 // pred_check_branch
          %711 = sbr.rel (%p709) target = $region88
        $region87: #{dueling_dqn_forward.5} parent=83 // pred_region
          %s712 = sand.u32 %s91, 1
          %s713 = sand.u32 %s91, 1
          %s714 = smul.addr %s713, 8
          %s715 = scalar_lea.vmem [#allocation2], %s714
        $region88: #{dueling_dqn_forward.5} parent=83 // pred_fallthru
          _
      $region84: #{dueling_dqn_forward.5} parent=5 // pred_fallthru
        _
    $region6: #{dueling_dqn_forward.5} parent=1 // loop_footer
      %s13 = sadd.s32 1, %s9
    $region7: #{dueling_dqn_forward.5} parent=1 // loop_footer_branch
      %8 = sbr.rel target = $region3
    $region8: #{dueling_dqn_forward.5} parent=1 // loop_exit
      _

// kernel: dueling_dqn_forward.6
$region0: #{dueling_dqn_forward.6}
  #allocation0 [shape = 'u32[]', space=smem, size = 0x4, offset = 0x4, fixed_abs, tag = 'smem constant byte address 0x4 - core index']
  #allocation1 [shape = 'u32[144,128]{1,0:T(1,128)}', space=vmem, size = 0x12000, scoped, tag = 'internal scratch']
  %s0 = inlined_call_operand.vmem [shape: bf16[2,576], index: 0, kind: input, shape index: {}]
  %s1 = inlined_call_operand.vmem [shape: bf16[576,64], index: 1, kind: input, shape index: {}]
  %s2 = inlined_call_operand.vmem [shape: f32[1,64], index: 2, kind: input, shape index: {}]
  %s3 = inlined_call_operand.vmem [shape: bf16[2,64], index: 3, kind: output, shape index: {}]
  %s4 = sld [smem:[#allocation0]]
  $region22: #{dueling_dqn_forward.6} parent=0
    _
  %s6 = ssub.s32 1, %s4
  %s7 = scalar_select 0, %s6, %s4
  // Predicated region
  $region2: #{dueling_dqn_forward.6} parent=0 // pred_check
    _
  $region3: #{dueling_dqn_forward.6} parent=0 // pred_check_branch
    %9 = sbr.rel (0) target = $region5
  $region4: #{dueling_dqn_forward.6} parent=0 // pred_region
    _
  $region5: #{dueling_dqn_forward.6} parent=0 // pred_fallthru
    _
  // Predicated region
  $region6: #{dueling_dqn_forward.6} parent=0 // pred_check
    _
  $region7: #{dueling_dqn_forward.6} parent=0 // pred_check_branch
    %11 = sbr.rel (0) target = $region9
  $region8: #{dueling_dqn_forward.6} parent=0 // pred_region
    _
  $region9: #{dueling_dqn_forward.6} parent=0 // pred_fallthru
    _
  // Predicated region
  $region10: #{dueling_dqn_forward.6} parent=0 // pred_check
    _
  $region11: #{dueling_dqn_forward.6} parent=0 // pred_check_branch
    %13 = sbr.rel (0) target = $region13
  $region12: #{dueling_dqn_forward.6} parent=0 // pred_region
    _
  $region13: #{dueling_dqn_forward.6} parent=0 // pred_fallthru
    _
  %v15 = vld [vmem:[%s0] sm:$0x1f]
  %v16 = vld [vmem:[%s1] sm:$0xf]
  %v17 = vld [vmem:[%s1 + $0x4] sm:$0xf]
  %v18 = vld [vmem:[%s1 + $0x8] sm:$0xf]
  %v19 = vld [vmem:[%s1 + $0xc] sm:$0xf]
  %v20 = vld [vmem:[%s1 + $0x10] sm:$0xf]
  %v21 = vld [vmem:[%s1 + $0x14] sm:$0xf]
  %v22 = vld [vmem:[%s1 + $0x18] sm:$0xf]
  %v23 = vld [vmem:[%s1 + $0x1c] sm:$0xf]
  %v24 = vld [vmem:[%s1 + $0x20] sm:$0xf]
  %v25 = vld [vmem:[%s1 + $0x24] sm:$0xf]
  %v26 = vld [vmem:[%s1 + $0x28] sm:$0xf]
  %v27 = vld [vmem:[%s1 + $0x2c] sm:$0xf]
  %v28 = vld [vmem:[%s1 + $0x30] sm:$0xf]
  %v29 = vld [vmem:[%s1 + $0x34] sm:$0xf]
  %v30 = vld [vmem:[%s1 + $0x38] sm:$0xf]
  %v31 = vld [vmem:[%s1 + $0x3c] sm:$0xf]
  %v32 = vld [vmem:[%s1 + $0x40] sm:$0xf]
  %v33 = vld [vmem:[%s1 + $0x44] sm:$0xf]
  %v34 = vld [vmem:[%s1 + $0x48] sm:$0xf]
  %v35 = vld [vmem:[%s1 + $0x4c] sm:$0xf]
  %v36 = vld [vmem:[%s1 + $0x50] sm:$0xf]
  %v37 = vld [vmem:[%s1 + $0x54] sm:$0xf]
  %v38 = vld [vmem:[%s1 + $0x58] sm:$0xf]
  %v39 = vld [vmem:[%s1 + $0x5c] sm:$0xf]
  %v40 = vld [vmem:[%s1 + $0x60] sm:$0xf]
  %v41 = vld [vmem:[%s1 + $0x64] sm:$0xf]
  %v42 = vld [vmem:[%s1 + $0x68] sm:$0xf]
  %v43 = vld [vmem:[%s1 + $0x6c] sm:$0xf]
  %v44 = vld [vmem:[%s1 + $0x70] sm:$0xf]
  %v45 = vld [vmem:[%s1 + $0x74] sm:$0xf]
  %v46 = vld [vmem:[%s1 + $0x78] sm:$0xf]
  %v47 = vld [vmem:[%s1 + $0x7c] sm:$0xf]
  %v48 = vld [vmem:[%s1 + $0x80] sm:$0xf]
  %v49 = vld [vmem:[%s1 + $0x84] sm:$0xf]
  %v50 = vld [vmem:[%s1 + $0x88] sm:$0xf]
  %v51 = vld [vmem:[%s1 + $0x8c] sm:$0xf]
  %v52 = vld [vmem:[%s1 + $0x90] sm:$0xf]
  %v53 = vld [vmem:[%s1 + $0x94] sm:$0xf]
  %v54 = vld [vmem:[%s1 + $0x98] sm:$0xf]
  %v55 = vld [vmem:[%s1 + $0x9c] sm:$0xf]
  %v56 = vld [vmem:[%s1 + $0xa0] sm:$0xf]
  %v57 = vld [vmem:[%s1 + $0xa4] sm:$0xf]
  %v58 = vld [vmem:[%s1 + $0xa8] sm:$0xf]
  %v59 = vld [vmem:[%s1 + $0xac] sm:$0xf]
  %v60 = vld [vmem:[%s1 + $0xb0] sm:$0xf]
  %v61 = vld [vmem:[%s1 + $0xb4] sm:$0xf]
  %v62 = vld [vmem:[%s1 + $0xb8] sm:$0xf]
  %v63 = vld [vmem:[%s1 + $0xbc] sm:$0xf]
  %v64 = vld [vmem:[%s1 + $0xc0] sm:$0xf]
  %v65 = vld [vmem:[%s1 + $0xc4] sm:$0xf]
  %v66 = vld [vmem:[%s1 + $0xc8] sm:$0xf]
  %v67 = vld [vmem:[%s1 + $0xcc] sm:$0xf]
  %v68 = vld [vmem:[%s1 + $0xd0] sm:$0xf]
  %v69 = vld [vmem:[%s1 + $0xd4] sm:$0xf]
  %v70 = vld [vmem:[%s1 + $0xd8] sm:$0xf]
  %v71 = vld [vmem:[%s1 + $0xdc] sm:$0xf]
  %v72 = vld [vmem:[%s1 + $0xe0] sm:$0xf]
  %v73 = vld [vmem:[%s1 + $0xe4] sm:$0xf]
  %v74 = vld [vmem:[%s1 + $0xe8] sm:$0xf]
  %v75 = vld [vmem:[%s1 + $0xec] sm:$0xf]
  %v76 = vld [vmem:[%s1 + $0xf0] sm:$0xf]
  %v77 = vld [vmem:[%s1 + $0xf4] sm:$0xf]
  %v78 = vld [vmem:[%s1 + $0xf8] sm:$0xf]
  %v79 = vld [vmem:[%s1 + $0xfc] sm:$0xf]
  %v80 = vld [vmem:[%s1 + $0x100] sm:$0xf]
  %v81 = vld [vmem:[%s1 + $0x104] sm:$0xf]
  %v82 = vld [vmem:[%s1 + $0x108] sm:$0xf]
  %v83 = vld [vmem:[%s1 + $0x10c] sm:$0xf]
  %v84 = vld [vmem:[%s1 + $0x110] sm:$0xf]
  %v85 = vld [vmem:[%s1 + $0x114] sm:$0xf]
  %v86 = vld [vmem:[%s1 + $0x118] sm:$0xf]
  %v87 = vld [vmem:[%s1 + $0x11c] sm:$0xf]
  %v88 = vld [vmem:[%s2] sm:$0x1]
  %v90 = vlaneseq
  %v91 = vshrl.u32 %v90, 7
  %v92 = vsub.s32 0, %v91
  %v93 = vrot.slane %v88, %v92
  %v96 = vcombine.high %v15, %v15
  %v98 = vunpack.c.l.s4 1966171168
  %v99 = vunpack.c.0.s8 %v98
  %v100 = vlaneseq
  %v101 = vshrl.u32 %v100, 7
  %v102 = vsub.s32 %v99, %v101
  %v103 = vrot.slane %v15, %v102
  %v105 = vunpack.c.l.s4 1966171168
  %v106 = vunpack.c.0.s8 %v105
  %v107 = vlaneseq
  %v108 = vshrl.u32 %v107, 7
  %v109 = vsub.s32 %v106, %v108
  %v110 = vrot.slane %v96, %v109
  %v111 = vcombine.high %v103, %v103
  %v113 = vunpack.c.l.s4 1966171168
  %v114 = vunpack.c.0.s8 %v113
  %v115 = vlaneseq
  %v116 = vshrl.u32 %v115, 7
  %v117 = vsub.s32 %v114, %v116
  %v118 = vrot.slane %v103, %v117
  %v120 = vunpack.c.l.s4 1966171168
  %v121 = vunpack.c.0.s8 %v120
  %v122 = vlaneseq
  %v123 = vshrl.u32 %v122, 7
  %v124 = vsub.s32 %v121, %v123
  %v125 = vrot.slane %v110, %v124
  %v127 = vunpack.c.l.s4 1966171168
  %v128 = vunpack.c.0.s8 %v127
  %v129 = vlaneseq
  %v130 = vshrl.u32 %v129, 7
  %v131 = vsub.s32 %v128, %v130
  %v132 = vrot.slane %v111, %v131
  %v133 = vcombine.high %v118, %v118
  %v134 = vcombine.high %v132, %v132
  %v211 = vunpack.c.l.b16 %v16
  %v212 = vunpack.c.l.b16 %v17
  %v213 = vunpack.c.l.b16 %v18
  %v214 = vunpack.c.l.b16 %v19
  %v215 = vunpack.c.l.b16 %v20
  %v216 = vunpack.c.l.b16 %v21
  %v217 = vunpack.c.l.b16 %v22
  %v218 = vunpack.c.l.b16 %v23
  %v219 = vunpack.c.l.b16 %v24
  %v220 = vunpack.c.l.b16 %v25
  %v221 = vunpack.c.l.b16 %v26
  %v222 = vunpack.c.l.b16 %v27
  %v223 = vunpack.c.l.b16 %v28
  %v224 = vunpack.c.l.b16 %v29
  %v225 = vunpack.c.l.b16 %v30
  %v226 = vunpack.c.l.b16 %v31
  %v227 = vunpack.c.l.b16 %v32
  %v228 = vunpack.c.l.b16 %v33
  %v229 = vunpack.c.l.b16 %v34
  %v230 = vunpack.c.l.b16 %v35
  %v231 = vunpack.c.l.b16 %v36
  %v232 = vunpack.c.l.b16 %v37
  %v233 = vunpack.c.l.b16 %v38
  %v234 = vunpack.c.l.b16 %v39
  %v235 = vunpack.c.l.b16 %v40
  %v236 = vunpack.c.l.b16 %v41
  %v237 = vunpack.c.l.b16 %v42
  %v238 = vunpack.c.l.b16 %v43
  %v239 = vunpack.c.l.b16 %v44
  %v240 = vunpack.c.l.b16 %v45
  %v241 = vunpack.c.l.b16 %v46
  %v242 = vunpack.c.l.b16 %v47
  %v243 = vunpack.c.l.b16 %v48
  %v244 = vunpack.c.l.b16 %v49
  %v245 = vunpack.c.l.b16 %v50
  %v246 = vunpack.c.l.b16 %v51
  %v247 = vunpack.c.l.b16 %v52
  %v248 = vunpack.c.l.b16 %v53
  %v249 = vunpack.c.l.b16 %v54
  %v250 = vunpack.c.l.b16 %v55
  %v251 = vunpack.c.l.b16 %v56
  %v252 = vunpack.c.l.b16 %v57
  %v253 = vunpack.c.l.b16 %v58
  %v254 = vunpack.c.l.b16 %v59
  %v255 = vunpack.c.l.b16 %v60
  %v256 = vunpack.c.l.b16 %v61
  %v257 = vunpack.c.l.b16 %v62
  %v258 = vunpack.c.l.b16 %v63
  %v259 = vunpack.c.l.b16 %v64
  %v260 = vunpack.c.l.b16 %v65
  %v261 = vunpack.c.l.b16 %v66
  %v262 = vunpack.c.l.b16 %v67
  %v263 = vunpack.c.l.b16 %v68
  %v264 = vunpack.c.l.b16 %v69
  %v265 = vunpack.c.l.b16 %v70
  %v266 = vunpack.c.l.b16 %v71
  %v267 = vunpack.c.l.b16 %v72
  %v268 = vunpack.c.l.b16 %v73
  %v269 = vunpack.c.l.b16 %v74
  %v270 = vunpack.c.l.b16 %v75
  %v271 = vunpack.c.l.b16 %v76
  %v272 = vunpack.c.l.b16 %v77
  %v273 = vunpack.c.l.b16 %v78
  %v274 = vunpack.c.l.b16 %v79
  %v275 = vunpack.c.l.b16 %v80
  %v276 = vunpack.c.l.b16 %v81
  %v277 = vunpack.c.l.b16 %v82
  %v278 = vunpack.c.l.b16 %v83
  %v279 = vunpack.c.l.b16 %v84
  %v280 = vunpack.c.l.b16 %v85
  %v281 = vunpack.c.l.b16 %v86
  %v282 = vunpack.c.l.b16 %v87
  %v283 = vpack.c.b16 %v212, %v211
  %v284 = vpack.c.b16 %v214, %v213
  %v285 = vpack.c.b16 %v216, %v215
  %v286 = vpack.c.b16 %v218, %v217
  %v287 = vpack.c.b16 %v220, %v219
  %v288 = vpack.c.b16 %v222, %v221
  %v289 = vpack.c.b16 %v224, %v223
  %v290 = vpack.c.b16 %v226, %v225
  %v291 = vpack.c.b16 %v228, %v227
  %v292 = vpack.c.b16 %v230, %v229
  %v293 = vpack.c.b16 %v232, %v231
  %v294 = vpack.c.b16 %v234, %v233
  %v295 = vpack.c.b16 %v236, %v235
  %v296 = vpack.c.b16 %v238, %v237
  %v297 = vpack.c.b16 %v240, %v239
  %v298 = vpack.c.b16 %v242, %v241
  %v299 = vpack.c.b16 %v244, %v243
  %v300 = vpack.c.b16 %v246, %v245
  %v301 = vpack.c.b16 %v248, %v247
  %v302 = vpack.c.b16 %v250, %v249
  %v303 = vpack.c.b16 %v252, %v251
  %v304 = vpack.c.b16 %v254, %v253
  %v305 = vpack.c.b16 %v256, %v255
  %v306 = vpack.c.b16 %v258, %v257
  %v307 = vpack.c.b16 %v260, %v259
  %v308 = vpack.c.b16 %v262, %v261
  %v309 = vpack.c.b16 %v264, %v263
  %v310 = vpack.c.b16 %v266, %v265
  %v311 = vpack.c.b16 %v268, %v267
  %v312 = vpack.c.b16 %v270, %v269
  %v313 = vpack.c.b16 %v272, %v271
  %v314 = vpack.c.b16 %v274, %v273
  %v315 = vpack.c.b16 %v276, %v275
  %v316 = vpack.c.b16 %v278, %v277
  %v317 = vpack.c.b16 %v280, %v279
  %v318 = vpack.c.b16 %v282, %v281
  %vm355 = vcmask 523264
  %v357 = vsel %vm355, %v125, 0
  %359 = vmatprep.subr.bf16.mxu0 0
  %360 = vmatpush1.bf16.msra.mxu0 %v290
  %361 = vmatprep.subr.bf16.mxu0 0
  %362 = vmatpush1.bf16.msra.mxu0 %v289
  %363 = vmatprep.subr.bf16.mxu0 0
  %364 = vmatpush1.bf16.msra.mxu0 %v288
  %365 = vmatprep.subr.bf16.mxu0 0
  %366 = vmatpush1.bf16.msra.mxu0 %v287
  %367 = vmatprep.subr.bf16.mxu0 0
  %368 = vmatpush1.bf16.msra.mxu0 %v286
  %369 = vmatprep.subr.bf16.mxu0 0
  %370 = vmatpush1.bf16.msra.mxu0 %v285
  %371 = vmatprep.subr.bf16.mxu0 0
  %372 = vmatpush1.bf16.msra.mxu0 %v284
  %373 = vmatprep.subr.bf16.mxu0 0
  %374 = vmatpush1.bf16.msra.mxu0 %v283
  %375 = vmatprep.subr.bf16.mxu0 0
  %376 = vmatpush2.bf16.msra.mxu0 %v298
  %377 = vmatprep.subr.bf16.mxu0 0
  %378 = vmatpush2.bf16.msra.mxu0 %v297
  %379 = vmatprep.subr.bf16.mxu0 0
  %380 = vmatpush2.bf16.msra.mxu0 %v296
  %381 = vmatprep.subr.bf16.mxu0 0
  %382 = vmatpush2.bf16.msra.mxu0 %v295
  %383 = vmatprep.subr.bf16.mxu0 0
  %384 = vmatpush2.bf16.msra.mxu0 %v294
  %385 = vmatprep.subr.bf16.mxu0 0
  %386 = vmatpush2.bf16.msra.mxu0 %v293
  %387 = vmatprep.subr.bf16.mxu0 0
  %388 = vmatpush2.bf16.msra.mxu0 %v292
  %389 = vmatprep.subr.bf16.mxu0 0
  %390 = vmatpush2.bf16.msra.mxu0 %v291
  %391 = vmatprep.mubr.bf16.mxu0 %v132
  %392 = vmatmul.mubr.bf16.gmra.mxu0 %v118
  %v393 = vpop.f32.mrf.mxu0
  %v394 = vadd.f32 %v93, %v393
  %v395 = vpop.f32.mrf.mxu0
  %v396 = vpop.f32.mrf.mxu0
  %v397 = vpop.f32.mrf.mxu0
  %398 = vdwg.mxu0
  %399 = vmatprep.subr.bf16.mxu0 0
  %400 = vmatpush1.bf16.msra.mxu0 %v306
  %401 = vmatprep.subr.bf16.mxu0 0
  %402 = vmatpush1.bf16.msra.mxu0 %v305
  %403 = vmatprep.subr.bf16.mxu0 0
  %404 = vmatpush1.bf16.msra.mxu0 %v304
  %405 = vmatprep.subr.bf16.mxu0 0
  %406 = vmatpush1.bf16.msra.mxu0 %v303
  %407 = vmatprep.subr.bf16.mxu0 0
  %408 = vmatpush1.bf16.msra.mxu0 %v302
  %409 = vmatprep.subr.bf16.mxu0 0
  %410 = vmatpush1.bf16.msra.mxu0 %v301
  %411 = vmatprep.subr.bf16.mxu0 0
  %412 = vmatpush1.bf16.msra.mxu0 %v300
  %413 = vmatprep.subr.bf16.mxu0 0
  %414 = vmatpush1.bf16.msra.mxu0 %v299
  %415 = vmatprep.subr.bf16.mxu0 0
  %416 = vmatpush2.bf16.msra.mxu0 %v314
  %417 = vmatprep.subr.bf16.mxu0 0
  %418 = vmatpush2.bf16.msra.mxu0 %v313
  %419 = vmatprep.subr.bf16.mxu0 0
  %420 = vmatpush2.bf16.msra.mxu0 %v312
  %421 = vmatprep.subr.bf16.mxu0 0
  %422 = vmatpush2.bf16.msra.mxu0 %v311
  %423 = vmatprep.subr.bf16.mxu0 0
  %424 = vmatpush2.bf16.msra.mxu0 %v310
  %425 = vmatprep.subr.bf16.mxu0 0
  %426 = vmatpush2.bf16.msra.mxu0 %v309
  %427 = vmatprep.subr.bf16.mxu0 0
  %428 = vmatpush2.bf16.msra.mxu0 %v308
  %429 = vmatprep.subr.bf16.mxu0 0
  %430 = vmatpush2.bf16.msra.mxu0 %v307
  %431 = vmatprep.mubr.bf16.mxu0 %v134
  %432 = vmatmul.mubr.bf16.gmra.mxu0 %v133
  %v433 = vpop.f32.mrf.mxu0
  %v434 = vadd.f32 %v394, %v433
  %v435 = vpop.f32.mrf.mxu0
  %v436 = vpop.f32.mrf.mxu0
  %v437 = vpop.f32.mrf.mxu0
  %438 = vdwg.mxu0
  %439 = vmatprep.subr.bf16.mxu0 0
  %440 = vmatpush1.bf16.msra.mxu0 0
  %441 = vmatprep.subr.bf16.mxu0 0
  %442 = vmatpush1.bf16.msra.mxu0 0
  %443 = vmatprep.subr.bf16.mxu0 0
  %444 = vmatpush1.bf16.msra.mxu0 0
  %445 = vmatprep.subr.bf16.mxu0 0
  %446 = vmatpush1.bf16.msra.mxu0 0
  %447 = vmatprep.subr.bf16.mxu0 0
  %448 = vmatpush1.bf16.msra.mxu0 %v318
  %449 = vmatprep.subr.bf16.mxu0 0
  %450 = vmatpush1.bf16.msra.mxu0 %v317
  %451 = vmatprep.subr.bf16.mxu0 0
  %452 = vmatpush1.bf16.msra.mxu0 %v316
  %453 = vmatprep.subr.bf16.mxu0 0
  %454 = vmatpush1.bf16.msra.mxu0 %v315
  %455 = vmatprep.subr.bf16.mxu0 0
  %456 = vmatpush2.bf16.msra.mxu0 0
  %457 = vmatprep.subr.bf16.mxu0 0
  %458 = vmatpush2.bf16.msra.mxu0 0
  %459 = vmatprep.subr.bf16.mxu0 0
  %460 = vmatpush2.bf16.msra.mxu0 0
  %461 = vmatprep.subr.bf16.mxu0 0
  %462 = vmatpush2.bf16.msra.mxu0 0
  %463 = vmatprep.subr.bf16.mxu0 0
  %464 = vmatpush2.bf16.msra.mxu0 0
  %465 = vmatprep.subr.bf16.mxu0 0
  %466 = vmatpush2.bf16.msra.mxu0 0
  %467 = vmatprep.subr.bf16.mxu0 0
  %468 = vmatpush2.bf16.msra.mxu0 0
  %469 = vmatprep.subr.bf16.mxu0 0
  %470 = vmatpush2.bf16.msra.mxu0 0
  %471 = vmatprep.mubr.bf16.mxu0 0
  %472 = vmatmul.mubr.bf16.gmra.mxu0 %v357
  %v473 = vpop.f32.mrf.mxu0
  %v474 = vadd.f32 %v434, %v473
  %v475 = vpop.f32.mrf.mxu0
  %v476 = vpop.f32.mrf.mxu0
  %v477 = vpop.f32.mrf.mxu0
  %478 = vdwg.mxu0
  %v479 = vmax.f32 %v474, 0.0
  %v480 = vpack.c.bf16 %v479, %v479
  %vm481 = vcmask 516096
  %482 = vst.msk [vmem:[%s3] sm:$0x1] %vm481, %v480
  // Predicated region
  $region14: #{dueling_dqn_forward.6} parent=0 // pred_check
    _
  $region15: #{dueling_dqn_forward.6} parent=0 // pred_check_branch
    %484 = sbr.rel (0) target = $region17
  $region16: #{dueling_dqn_forward.6} parent=0 // pred_region
    _
  $region17: #{dueling_dqn_forward.6} parent=0 // pred_fallthru
    _
  // Predicated region
  $region18: #{dueling_dqn_forward.6} parent=0 // pred_check
    _
  $region19: #{dueling_dqn_forward.6} parent=0 // pred_check_branch
    %486 = sbr.rel (0) target = $region21
  $region20: #{dueling_dqn_forward.6} parent=0 // pred_region
    _
  $region21: #{dueling_dqn_forward.6} parent=0 // pred_fallthru
    _

// kernel: dueling_dqn_forward.7
$region0: #{dueling_dqn_forward.7}
  #allocation0 [shape = 'u32[]', space=smem, size = 0x4, offset = 0x4, fixed_abs, tag = 'smem constant byte address 0x4 - core index']
  #allocation1 [shape = 'u32[144,128]{1,0:T(1,128)}', space=vmem, size = 0x12000, scoped, tag = 'internal scratch']
  %s0 = inlined_call_operand.vmem [shape: bf16[2,64], index: 0, kind: input, shape index: {}]
  %s1 = inlined_call_operand.vmem [shape: bf16[64,1024], index: 1, kind: input, shape index: {}]
  %s2 = inlined_call_operand.vmem [shape: f32[1,1024], index: 2, kind: input, shape index: {}]
  %s3 = inlined_call_operand.vmem [shape: bf16[1024,7], index: 3, kind: input, shape index: {}]
  %s4 = inlined_call_operand.vmem [shape: f32[1,7], index: 4, kind: input, shape index: {}]
  %s5 = inlined_call_operand.hbm [shape: f32[2,6], index: 5, kind: output, shape index: {}]
  %s6 = sld [smem:[#allocation0]]
  $region30: #{dueling_dqn_forward.7} parent=0
    _
  %s8 = ssub.s32 1, %s6
  %s9 = scalar_select 0, %s8, %s6
  $region1: #{dueling_dqn_forward.7} parent=0
    #allocation2 [shape = 'u8[1024]{0}', space=vmem, size = 0x400, scoped, tag = 'output window, operand 0, single buffered']
    #allocation3 [shape = 's32[1]{0}', space=sflag, size = 0x4, scoped, tag = 'scoped memory for dueling_dqn_forward.7']
    %10 = vsyncpa [#allocation3], 0
    // Predicated region
    $region2: #{dueling_dqn_forward.7} parent=1 // pred_check
      _
    $region3: #{dueling_dqn_forward.7} parent=1 // pred_check_branch
      %12 = sbr.rel (0) target = $region5
    $region4: #{dueling_dqn_forward.7} parent=1 // pred_region
      _
    $region5: #{dueling_dqn_forward.7} parent=1 // pred_fallthru
      _
    // Predicated region
    $region6: #{dueling_dqn_forward.7} parent=1 // pred_check
      _
    $region7: #{dueling_dqn_forward.7} parent=1 // pred_check_branch
      %14 = sbr.rel (0) target = $region9
    $region8: #{dueling_dqn_forward.7} parent=1 // pred_region
      _
    $region9: #{dueling_dqn_forward.7} parent=1 // pred_fallthru
      _
    // Predicated region
    $region10: #{dueling_dqn_forward.7} parent=1 // pred_check
      _
    $region11: #{dueling_dqn_forward.7} parent=1 // pred_check_branch
      %16 = sbr.rel (0) target = $region13
    $region12: #{dueling_dqn_forward.7} parent=1 // pred_region
      _
    $region13: #{dueling_dqn_forward.7} parent=1 // pred_fallthru
      _
    // Predicated region
    $region14: #{dueling_dqn_forward.7} parent=1 // pred_check
      _
    $region15: #{dueling_dqn_forward.7} parent=1 // pred_check_branch
      %18 = sbr.rel (0) target = $region17
    $region16: #{dueling_dqn_forward.7} parent=1 // pred_region
      _
    $region17: #{dueling_dqn_forward.7} parent=1 // pred_fallthru
      _
    // Predicated region
    $region18: #{dueling_dqn_forward.7} parent=1 // pred_check
      _
    $region19: #{dueling_dqn_forward.7} parent=1 // pred_check_branch
      %20 = sbr.rel (0) target = $region21
    $region20: #{dueling_dqn_forward.7} parent=1 // pred_region
      _
    $region21: #{dueling_dqn_forward.7} parent=1 // pred_fallthru
      _
    %v22 = vld [vmem:[%s0] sm:$0x1]
    %v23 = vld [vmem:[%s1] sm:$0xff]
    %v24 = vld [vmem:[%s1 + $0x8] sm:$0xff]
    %v25 = vld [vmem:[%s1 + $0x10] sm:$0xff]
    %v26 = vld [vmem:[%s1 + $0x18] sm:$0xff]
    %v27 = vld [vmem:[%s1 + $0x20] sm:$0xff]
    %v28 = vld [vmem:[%s1 + $0x28] sm:$0xff]
    %v29 = vld [vmem:[%s1 + $0x30] sm:$0xff]
    %v30 = vld [vmem:[%s1 + $0x38] sm:$0xff]
    %v31 = vld [vmem:[%s1 + $0x40] sm:$0xff]
    %v32 = vld [vmem:[%s1 + $0x48] sm:$0xff]
    %v33 = vld [vmem:[%s1 + $0x50] sm:$0xff]
    %v34 = vld [vmem:[%s1 + $0x58] sm:$0xff]
    %v35 = vld [vmem:[%s1 + $0x60] sm:$0xff]
    %v36 = vld [vmem:[%s1 + $0x68] sm:$0xff]
    %v37 = vld [vmem:[%s1 + $0x70] sm:$0xff]
    %v38 = vld [vmem:[%s1 + $0x78] sm:$0xff]
    %v39 = vld [vmem:[%s1 + $0x80] sm:$0xff]
    %v40 = vld [vmem:[%s1 + $0x88] sm:$0xff]
    %v41 = vld [vmem:[%s1 + $0x90] sm:$0xff]
    %v42 = vld [vmem:[%s1 + $0x98] sm:$0xff]
    %v43 = vld [vmem:[%s1 + $0xa0] sm:$0xff]
    %v44 = vld [vmem:[%s1 + $0xa8] sm:$0xff]
    %v45 = vld [vmem:[%s1 + $0xb0] sm:$0xff]
    %v46 = vld [vmem:[%s1 + $0xb8] sm:$0xff]
    %v47 = vld [vmem:[%s1 + $0xc0] sm:$0xff]
    %v48 = vld [vmem:[%s1 + $0xc8] sm:$0xff]
    %v49 = vld [vmem:[%s1 + $0xd0] sm:$0xff]
    %v50 = vld [vmem:[%s1 + $0xd8] sm:$0xff]
    %v51 = vld [vmem:[%s1 + $0xe0] sm:$0xff]
    %v52 = vld [vmem:[%s1 + $0xe8] sm:$0xff]
    %v53 = vld [vmem:[%s1 + $0xf0] sm:$0xff]
    %v54 = vld [vmem:[%s1 + $0xf8] sm:$0xff]
    %v55 = vld [vmem:[%s2] sm:$0xff]
    %v57 = vlaneseq
    %v58 = vshrl.u32 %v57, 7
    %v59 = vsub.s32 0, %v58
    %v60 = vrot.slane %v55, %v59
    %v61 = vlaneseq
    %v62 = vshrl.u32 %v61, 7
    %v63 = vsub.s32 1, %v62
    %v64 = vrot.slane %v55, %v63
    %v65 = vlaneseq
    %v66 = vshrl.u32 %v65, 7
    %v67 = vsub.s32 2, %v66
    %v68 = vrot.slane %v55, %v67
    %v69 = vlaneseq
    %v70 = vshrl.u32 %v69, 7
    %v71 = vsub.s32 3, %v70
    %v72 = vrot.slane %v55, %v71
    %v73 = vlaneseq
    %v74 = vshrl.u32 %v73, 7
    %v75 = vsub.s32 4, %v74
    %v76 = vrot.slane %v55, %v75
    %v77 = vlaneseq
    %v78 = vshrl.u32 %v77, 7
    %v79 = vsub.s32 5, %v78
    %v80 = vrot.slane %v55, %v79
    %v81 = vlaneseq
    %v82 = vshrl.u32 %v81, 7
    %v83 = vsub.s32 6, %v82
    %v84 = vrot.slane %v55, %v83
    %v85 = vlaneseq
    %v86 = vshrl.u32 %v85, 7
    %v87 = vsub.s32 7, %v86
    %v88 = vrot.slane %v55, %v87
    %v129 = vunpack.c.l.b16 %v23
    %v130 = vunpack.c.h.b16 %v23
    %v131 = vunpack.c.l.b16 %v24
    %v132 = vunpack.c.h.b16 %v24
    %v133 = vunpack.c.l.b16 %v25
    %v134 = vunpack.c.h.b16 %v25
    %v135 = vunpack.c.l.b16 %v26
    %v136 = vunpack.c.h.b16 %v26
    %v137 = vunpack.c.l.b16 %v27
    %v138 = vunpack.c.h.b16 %v27
    %v139 = vunpack.c.l.b16 %v28
    %v140 = vunpack.c.h.b16 %v28
    %v141 = vunpack.c.l.b16 %v29
    %v142 = vunpack.c.h.b16 %v29
    %v143 = vunpack.c.l.b16 %v30
    %v144 = vunpack.c.h.b16 %v30
    %v145 = vunpack.c.l.b16 %v31
    %v146 = vunpack.c.h.b16 %v31
    %v147 = vunpack.c.l.b16 %v32
    %v148 = vunpack.c.h.b16 %v32
    %v149 = vunpack.c.l.b16 %v33
    %v150 = vunpack.c.h.b16 %v33
    %v151 = vunpack.c.l.b16 %v34
    %v152 = vunpack.c.h.b16 %v34
    %v153 = vunpack.c.l.b16 %v35
    %v154 = vunpack.c.h.b16 %v35
    %v155 = vunpack.c.l.b16 %v36
    %v156 = vunpack.c.h.b16 %v36
    %v157 = vunpack.c.l.b16 %v37
    %v158 = vunpack.c.h.b16 %v37
    %v159 = vunpack.c.l.b16 %v38
    %v160 = vunpack.c.h.b16 %v38
    %v161 = vunpack.c.l.b16 %v39
    %v162 = vunpack.c.h.b16 %v39
    %v163 = vunpack.c.l.b16 %v40
    %v164 = vunpack.c.h.b16 %v40
    %v165 = vunpack.c.l.b16 %v41
    %v166 = vunpack.c.h.b16 %v41
    %v167 = vunpack.c.l.b16 %v42
    %v168 = vunpack.c.h.b16 %v42
    %v169 = vunpack.c.l.b16 %v43
    %v170 = vunpack.c.h.b16 %v43
    %v171 = vunpack.c.l.b16 %v44
    %v172 = vunpack.c.h.b16 %v44
    %v173 = vunpack.c.l.b16 %v45
    %v174 = vunpack.c.h.b16 %v45
    %v175 = vunpack.c.l.b16 %v46
    %v176 = vunpack.c.h.b16 %v46
    %v177 = vunpack.c.l.b16 %v47
    %v178 = vunpack.c.h.b16 %v47
    %v179 = vunpack.c.l.b16 %v48
    %v180 = vunpack.c.h.b16 %v48
    %v181 = vunpack.c.l.b16 %v49
    %v182 = vunpack.c.h.b16 %v49
    %v183 = vunpack.c.l.b16 %v50
    %v184 = vunpack.c.h.b16 %v50
    %v185 = vunpack.c.l.b16 %v51
    %v186 = vunpack.c.h.b16 %v51
    %v187 = vunpack.c.l.b16 %v52
    %v188 = vunpack.c.h.b16 %v52
    %v189 = vunpack.c.l.b16 %v53
    %v190 = vunpack.c.h.b16 %v53
    %v191 = vunpack.c.l.b16 %v54
    %v192 = vunpack.c.h.b16 %v54
    %v193 = vpack.c.b16 %v137, %v129
    %v194 = vpack.c.b16 %v138, %v130
    %v195 = vpack.c.b16 %v139, %v131
    %v196 = vpack.c.b16 %v140, %v132
    %v197 = vpack.c.b16 %v141, %v133
    %v198 = vpack.c.b16 %v142, %v134
    %v199 = vpack.c.b16 %v143, %v135
    %v200 = vpack.c.b16 %v144, %v136
    %v201 = vpack.c.b16 %v153, %v145
    %v202 = vpack.c.b16 %v154, %v146
    %v203 = vpack.c.b16 %v155, %v147
    %v204 = vpack.c.b16 %v156, %v148
    %v205 = vpack.c.b16 %v157, %v149
    %v206 = vpack.c.b16 %v158, %v150
    %v207 = vpack.c.b16 %v159, %v151
    %v208 = vpack.c.b16 %v160, %v152
    %v209 = vpack.c.b16 %v169, %v161
    %v210 = vpack.c.b16 %v170, %v162
    %v211 = vpack.c.b16 %v171, %v163
    %v212 = vpack.c.b16 %v172, %v164
    %v213 = vpack.c.b16 %v173, %v165
    %v214 = vpack.c.b16 %v174, %v166
    %v215 = vpack.c.b16 %v175, %v167
    %v216 = vpack.c.b16 %v176, %v168
    %v217 = vpack.c.b16 %v185, %v177
    %v218 = vpack.c.b16 %v186, %v178
    %v219 = vpack.c.b16 %v187, %v179
    %v220 = vpack.c.b16 %v188, %v180
    %v221 = vpack.c.b16 %v189, %v181
    %v222 = vpack.c.b16 %v190, %v182
    %v223 = vpack.c.b16 %v191, %v183
    %v224 = vpack.c.b16 %v192, %v184
    %vm257 = vcmask 523264
    %v259 = vsel %vm257, %v22, 0
    %261 = vmatprep.subr.bf16.mxu0 0
    %262 = vmatpush1.bf16.msra.mxu0 0
    %263 = vmatprep.subr.bf16.mxu0 0
    %264 = vmatpush1.bf16.msra.mxu0 0
    %265 = vmatprep.subr.bf16.mxu0 0
    %266 = vmatpush1.bf16.msra.mxu0 0
    %267 = vmatprep.subr.bf16.mxu0 0
    %268 = vmatpush1.bf16.msra.mxu0 0
    %269 = vmatprep.subr.bf16.mxu0 %v218
    %270 = vmatpush1.bf16.msra.mxu0 %v217
    %271 = vmatprep.subr.bf16.mxu0 %v210
    %272 = vmatpush1.bf16.msra.mxu0 %v209
    %273 = vmatprep.subr.bf16.mxu0 %v202
    %274 = vmatpush1.bf16.msra.mxu0 %v201
    %275 = vmatprep.subr.bf16.mxu0 %v194
    %276 = vmatpush1.bf16.msra.mxu0 %v193
    %277 = vmatprep.subr.bf16.mxu0 0
    %278 = vmatpush2.bf16.msra.mxu0 0
    %279 = vmatprep.subr.bf16.mxu0 0
    %280 = vmatpush2.bf16.msra.mxu0 0
    %281 = vmatprep.subr.bf16.mxu0 0
    %282 = vmatpush2.bf16.msra.mxu0 0
    %283 = vmatprep.subr.bf16.mxu0 0
    %284 = vmatpush2.bf16.msra.mxu0 0
    %285 = vmatprep.subr.bf16.mxu0 0
    %286 = vmatpush2.bf16.msra.mxu0 0
    %287 = vmatprep.subr.bf16.mxu0 0
    %288 = vmatpush2.bf16.msra.mxu0 0
    %289 = vmatprep.subr.bf16.mxu0 0
    %290 = vmatpush2.bf16.msra.mxu0 0
    %291 = vmatprep.subr.bf16.mxu0 0
    %292 = vmatpush2.bf16.msra.mxu0 0
    %293 = vmatprep.mubr.bf16.mxu0 0
    %294 = vmatmul.mubr.bf16.gmra.mxu0 %v259
    %v295 = vpop.f32.mrf.mxu0
    %v296 = vadd.f32 %v60, %v295
    %v297 = vpop.f32.mrf.mxu0
    %v298 = vadd.f32 %v64, %v297
    %v299 = vpop.f32.mrf.mxu0
    %v300 = vpop.f32.mrf.mxu0
    %301 = vdwg.mxu0
    %302 = vmatprep.subr.bf16.mxu0 0
    %303 = vmatpush1.bf16.msra.mxu0 0
    %304 = vmatprep.subr.bf16.mxu0 0
    %305 = vmatpush1.bf16.msra.mxu0 0
    %306 = vmatprep.subr.bf16.mxu0 0
    %307 = vmatpush1.bf16.msra.mxu0 0
    %308 = vmatprep.subr.bf16.mxu0 0
    %309 = vmatpush1.bf16.msra.mxu0 0
    %310 = vmatprep.subr.bf16.mxu0 %v220
    %311 = vmatpush1.bf16.msra.mxu0 %v219
    %312 = vmatprep.subr.bf16.mxu0 %v212
    %313 = vmatpush1.bf16.msra.mxu0 %v211
    %314 = vmatprep.subr.bf16.mxu0 %v204
    %315 = vmatpush1.bf16.msra.mxu0 %v203
    %316 = vmatprep.subr.bf16.mxu0 %v196
    %317 = vmatpush1.bf16.msra.mxu0 %v195
    %318 = vmatprep.subr.bf16.mxu0 0
    %319 = vmatpush2.bf16.msra.mxu0 0
    %320 = vmatprep.subr.bf16.mxu0 0
    %321 = vmatpush2.bf16.msra.mxu0 0
    %322 = vmatprep.subr.bf16.mxu0 0
    %323 = vmatpush2.bf16.msra.mxu0 0
    %324 = vmatprep.subr.bf16.mxu0 0
    %325 = vmatpush2.bf16.msra.mxu0 0
    %326 = vmatprep.subr.bf16.mxu0 0
    %327 = vmatpush2.bf16.msra.mxu0 0
    %328 = vmatprep.subr.bf16.mxu0 0
    %329 = vmatpush2.bf16.msra.mxu0 0
    %330 = vmatprep.subr.bf16.mxu0 0
    %331 = vmatpush2.bf16.msra.mxu0 0
    %332 = vmatprep.subr.bf16.mxu0 0
    %333 = vmatpush2.bf16.msra.mxu0 0
    %334 = vmatprep.mubr.bf16.mxu0 0
    %335 = vmatmul.mubr.bf16.gmra.mxu0 %v259
    %v336 = vpop.f32.mrf.mxu0
    %v337 = vadd.f32 %v68, %v336
    %v338 = vpop.f32.mrf.mxu0
    %v339 = vadd.f32 %v72, %v338
    %v340 = vpop.f32.mrf.mxu0
    %v341 = vpop.f32.mrf.mxu0
    %342 = vdwg.mxu0
    %343 = vmatprep.subr.bf16.mxu0 0
    %344 = vmatpush1.bf16.msra.mxu0 0
    %345 = vmatprep.subr.bf16.mxu0 0
    %346 = vmatpush1.bf16.msra.mxu0 0
    %347 = vmatprep.subr.bf16.mxu0 0
    %348 = vmatpush1.bf16.msra.mxu0 0
    %349 = vmatprep.subr.bf16.mxu0 0
    %350 = vmatpush1.bf16.msra.mxu0 0
    %351 = vmatprep.subr.bf16.mxu0 %v222
    %352 = vmatpush1.bf16.msra.mxu0 %v221
    %353 = vmatprep.subr.bf16.mxu0 %v214
    %354 = vmatpush1.bf16.msra.mxu0 %v213
    %355 = vmatprep.subr.bf16.mxu0 %v206
    %356 = vmatpush1.bf16.msra.mxu0 %v205
    %357 = vmatprep.subr.bf16.mxu0 %v198
    %358 = vmatpush1.bf16.msra.mxu0 %v197
    %359 = vmatprep.subr.bf16.mxu0 0
    %360 = vmatpush2.bf16.msra.mxu0 0
    %361 = vmatprep.subr.bf16.mxu0 0
    %362 = vmatpush2.bf16.msra.mxu0 0
    %363 = vmatprep.subr.bf16.mxu0 0
    %364 = vmatpush2.bf16.msra.mxu0 0
    %365 = vmatprep.subr.bf16.mxu0 0
    %366 = vmatpush2.bf16.msra.mxu0 0
    %367 = vmatprep.subr.bf16.mxu0 0
    %368 = vmatpush2.bf16.msra.mxu0 0
    %369 = vmatprep.subr.bf16.mxu0 0
    %370 = vmatpush2.bf16.msra.mxu0 0
    %371 = vmatprep.subr.bf16.mxu0 0
    %372 = vmatpush2.bf16.msra.mxu0 0
    %373 = vmatprep.subr.bf16.mxu0 0
    %374 = vmatpush2.bf16.msra.mxu0 0
    %375 = vmatprep.mubr.bf16.mxu0 0
    %376 = vmatmul.mubr.bf16.gmra.mxu0 %v259
    %v377 = vpop.f32.mrf.mxu0
    %v378 = vadd.f32 %v76, %v377
    %v379 = vpop.f32.mrf.mxu0
    %v380 = vadd.f32 %v80, %v379
    %v381 = vpop.f32.mrf.mxu0
    %v382 = vpop.f32.mrf.mxu0
    %383 = vdwg.mxu0
    %384 = vmatprep.subr.bf16.mxu0 0
    %385 = vmatpush1.bf16.msra.mxu0 0
    %386 = vmatprep.subr.bf16.mxu0 0
    %387 = vmatpush1.bf16.msra.mxu0 0
    %388 = vmatprep.subr.bf16.mxu0 0
    %389 = vmatpush1.bf16.msra.mxu0 0
    %390 = vmatprep.subr.bf16.mxu0 0
    %391 = vmatpush1.bf16.msra.mxu0 0
    %392 = vmatprep.subr.bf16.mxu0 %v224
    %393 = vmatpush1.bf16.msra.mxu0 %v223
    %394 = vmatprep.subr.bf16.mxu0 %v216
    %395 = vmatpush1.bf16.msra.mxu0 %v215
    %396 = vmatprep.subr.bf16.mxu0 %v208
    %397 = vmatpush1.bf16.msra.mxu0 %v207
    %398 = vmatprep.subr.bf16.mxu0 %v200
    %399 = vmatpush1.bf16.msra.mxu0 %v199
    %400 = vmatprep.subr.bf16.mxu0 0
    %401 = vmatpush2.bf16.msra.mxu0 0
    %402 = vmatprep.subr.bf16.mxu0 0
    %403 = vmatpush2.bf16.msra.mxu0 0
    %404 = vmatprep.subr.bf16.mxu0 0
    %405 = vmatpush2.bf16.msra.mxu0 0
    %406 = vmatprep.subr.bf16.mxu0 0
    %407 = vmatpush2.bf16.msra.mxu0 0
    %408 = vmatprep.subr.bf16.mxu0 0
    %409 = vmatpush2.bf16.msra.mxu0 0
    %410 = vmatprep.subr.bf16.mxu0 0
    %411 = vmatpush2.bf16.msra.mxu0 0
    %412 = vmatprep.subr.bf16.mxu0 0
    %413 = vmatpush2.bf16.msra.mxu0 0
    %414 = vmatprep.subr.bf16.mxu0 0
    %415 = vmatpush2.bf16.msra.mxu0 0
    %416 = vmatprep.mubr.bf16.mxu0 0
    %417 = vmatmul.mubr.bf16.gmra.mxu0 %v259
    %v418 = vpop.f32.mrf.mxu0
    %v419 = vadd.f32 %v84, %v418
    %v420 = vpop.f32.mrf.mxu0
    %v421 = vadd.f32 %v88, %v420
    %v422 = vpop.f32.mrf.mxu0
    %v423 = vpop.f32.mrf.mxu0
    %424 = vdwg.mxu0
    %v425 = vmax.f32 %v296, 0.0
    %v426 = vmax.f32 %v298, 0.0
    %v427 = vmax.f32 %v337, 0.0
    %v428 = vmax.f32 %v339, 0.0
    %v429 = vmax.f32 %v378, 0.0
    %v430 = vmax.f32 %v380, 0.0
    %v431 = vmax.f32 %v419, 0.0
    %v432 = vmax.f32 %v421, 0.0
    %v433 = vpack.c.bf16 %v425, %v425
    %v434 = vpack.c.bf16 %v426, %v426
    %v435 = vpack.c.bf16 %v427, %v427
    %v436 = vpack.c.bf16 %v428, %v428
    %v437 = vpack.c.bf16 %v429, %v429
    %v438 = vpack.c.bf16 %v430, %v430
    %v439 = vpack.c.bf16 %v431, %v431
    %v440 = vpack.c.bf16 %v432, %v432
    %v441 = vld [vmem:[%s3] sm:$0xf]
    %v442 = vld [vmem:[%s3 + $0x4] sm:$0xf]
    %v443 = vld [vmem:[%s3 + $0x8] sm:$0xf]
    %v444 = vld [vmem:[%s3 + $0xc] sm:$0xf]
    %v445 = vld [vmem:[%s3 + $0x10] sm:$0xf]
    %v446 = vld [vmem:[%s3 + $0x14] sm:$0xf]
    %v447 = vld [vmem:[%s3 + $0x18] sm:$0xf]
    %v448 = vld [vmem:[%s3 + $0x1c] sm:$0xf]
    %v449 = vld [vmem:[%s3 + $0x20] sm:$0xf]
    %v450 = vld [vmem:[%s3 + $0x24] sm:$0xf]
    %v451 = vld [vmem:[%s3 + $0x28] sm:$0xf]
    %v452 = vld [vmem:[%s3 + $0x2c] sm:$0xf]
    %v453 = vld [vmem:[%s3 + $0x30] sm:$0xf]
    %v454 = vld [vmem:[%s3 + $0x34] sm:$0xf]
    %v455 = vld [vmem:[%s3 + $0x38] sm:$0xf]
    %v456 = vld [vmem:[%s3 + $0x3c] sm:$0xf]
    %v457 = vld [vmem:[%s3 + $0x40] sm:$0xf]
    %v458 = vld [vmem:[%s3 + $0x44] sm:$0xf]
    %v459 = vld [vmem:[%s3 + $0x48] sm:$0xf]
    %v460 = vld [vmem:[%s3 + $0x4c] sm:$0xf]
    %v461 = vld [vmem:[%s3 + $0x50] sm:$0xf]
    %v462 = vld [vmem:[%s3 + $0x54] sm:$0xf]
    %v463 = vld [vmem:[%s3 + $0x58] sm:$0xf]
    %v464 = vld [vmem:[%s3 + $0x5c] sm:$0xf]
    %v465 = vld [vmem:[%s3 + $0x60] sm:$0xf]
    %v466 = vld [vmem:[%s3 + $0x64] sm:$0xf]
    %v467 = vld [vmem:[%s3 + $0x68] sm:$0xf]
    %v468 = vld [vmem:[%s3 + $0x6c] sm:$0xf]
    %v469 = vld [vmem:[%s3 + $0x70] sm:$0xf]
    %v470 = vld [vmem:[%s3 + $0x74] sm:$0xf]
    %v471 = vld [vmem:[%s3 + $0x78] sm:$0xf]
    %v472 = vld [vmem:[%s3 + $0x7c] sm:$0xf]
    %v473 = vld [vmem:[%s3 + $0x80] sm:$0xf]
    %v474 = vld [vmem:[%s3 + $0x84] sm:$0xf]
    %v475 = vld [vmem:[%s3 + $0x88] sm:$0xf]
    %v476 = vld [vmem:[%s3 + $0x8c] sm:$0xf]
    %v477 = vld [vmem:[%s3 + $0x90] sm:$0xf]
    %v478 = vld [vmem:[%s3 + $0x94] sm:$0xf]
    %v479 = vld [vmem:[%s3 + $0x98] sm:$0xf]
    %v480 = vld [vmem:[%s3 + $0x9c] sm:$0xf]
    %v481 = vld [vmem:[%s3 + $0xa0] sm:$0xf]
    %v482 = vld [vmem:[%s3 + $0xa4] sm:$0xf]
    %v483 = vld [vmem:[%s3 + $0xa8] sm:$0xf]
    %v484 = vld [vmem:[%s3 + $0xac] sm:$0xf]
    %v485 = vld [vmem:[%s3 + $0xb0] sm:$0xf]
    %v486 = vld [vmem:[%s3 + $0xb4] sm:$0xf]
    %v487 = vld [vmem:[%s3 + $0xb8] sm:$0xf]
    %v488 = vld [vmem:[%s3 + $0xbc] sm:$0xf]
    %v489 = vld [vmem:[%s3 + $0xc0] sm:$0xf]
    %v490 = vld [vmem:[%s3 + $0xc4] sm:$0xf]
    %v491 = vld [vmem:[%s3 + $0xc8] sm:$0xf]
    %v492 = vld [vmem:[%s3 + $0xcc] sm:$0xf]
    %v493 = vld [vmem:[%s3 + $0xd0] sm:$0xf]
    %v494 = vld [vmem:[%s3 + $0xd4] sm:$0xf]
    %v495 = vld [vmem:[%s3 + $0xd8] sm:$0xf]
    %v496 = vld [vmem:[%s3 + $0xdc] sm:$0xf]
    %v497 = vld [vmem:[%s3 + $0xe0] sm:$0xf]
    %v498 = vld [vmem:[%s3 + $0xe4] sm:$0xf]
    %v499 = vld [vmem:[%s3 + $0xe8] sm:$0xf]
    %v500 = vld [vmem:[%s3 + $0xec] sm:$0xf]
    %v501 = vld [vmem:[%s3 + $0xf0] sm:$0xf]
    %v502 = vld [vmem:[%s3 + $0xf4] sm:$0xf]
    %v503 = vld [vmem:[%s3 + $0xf8] sm:$0xf]
    %v504 = vld [vmem:[%s3 + $0xfc] sm:$0xf]
    %v505 = vld [vmem:[%s3 + $0x100] sm:$0xf]
    %v506 = vld [vmem:[%s3 + $0x104] sm:$0xf]
    %v507 = vld [vmem:[%s3 + $0x108] sm:$0xf]
    %v508 = vld [vmem:[%s3 + $0x10c] sm:$0xf]
    %v509 = vld [vmem:[%s3 + $0x110] sm:$0xf]
    %v510 = vld [vmem:[%s3 + $0x114] sm:$0xf]
    %v511 = vld [vmem:[%s3 + $0x118] sm:$0xf]
    %v512 = vld [vmem:[%s3 + $0x11c] sm:$0xf]
    %v513 = vld [vmem:[%s3 + $0x120] sm:$0xf]
    %v514 = vld [vmem:[%s3 + $0x124] sm:$0xf]
    %v515 = vld [vmem:[%s3 + $0x128] sm:$0xf]
    %v516 = vld [vmem:[%s3 + $0x12c] sm:$0xf]
    %v517 = vld [vmem:[%s3 + $0x130] sm:$0xf]
    %v518 = vld [vmem:[%s3 + $0x134] sm:$0xf]
    %v519 = vld [vmem:[%s3 + $0x138] sm:$0xf]
    %v520 = vld [vmem:[%s3 + $0x13c] sm:$0xf]
    %v521 = vld [vmem:[%s3 + $0x140] sm:$0xf]
    %v522 = vld [vmem:[%s3 + $0x144] sm:$0xf]
    %v523 = vld [vmem:[%s3 + $0x148] sm:$0xf]
    %v524 = vld [vmem:[%s3 + $0x14c] sm:$0xf]
    %v525 = vld [vmem:[%s3 + $0x150] sm:$0xf]
    %v526 = vld [vmem:[%s3 + $0x154] sm:$0xf]
    %v527 = vld [vmem:[%s3 + $0x158] sm:$0xf]
    %v528 = vld [vmem:[%s3 + $0x15c] sm:$0xf]
    %v529 = vld [vmem:[%s3 + $0x160] sm:$0xf]
    %v530 = vld [vmem:[%s3 + $0x164] sm:$0xf]
    %v531 = vld [vmem:[%s3 + $0x168] sm:$0xf]
    %v532 = vld [vmem:[%s3 + $0x16c] sm:$0xf]
    %v533 = vld [vmem:[%s3 + $0x170] sm:$0xf]
    %v534 = vld [vmem:[%s3 + $0x174] sm:$0xf]
    %v535 = vld [vmem:[%s3 + $0x178] sm:$0xf]
    %v536 = vld [vmem:[%s3 + $0x17c] sm:$0xf]
    %v537 = vld [vmem:[%s3 + $0x180] sm:$0xf]
    %v538 = vld [vmem:[%s3 + $0x184] sm:$0xf]
    %v539 = vld [vmem:[%s3 + $0x188] sm:$0xf]
    %v540 = vld [vmem:[%s3 + $0x18c] sm:$0xf]
    %v541 = vld [vmem:[%s3 + $0x190] sm:$0xf]
    %v542 = vld [vmem:[%s3 + $0x194] sm:$0xf]
    %v543 = vld [vmem:[%s3 + $0x198] sm:$0xf]
    %v544 = vld [vmem:[%s3 + $0x19c] sm:$0xf]
    %v545 = vld [vmem:[%s3 + $0x1a0] sm:$0xf]
    %v546 = vld [vmem:[%s3 + $0x1a4] sm:$0xf]
    %v547 = vld [vmem:[%s3 + $0x1a8] sm:$0xf]
    %v548 = vld [vmem:[%s3 + $0x1ac] sm:$0xf]
    %v549 = vld [vmem:[%s3 + $0x1b0] sm:$0xf]
    %v550 = vld [vmem:[%s3 + $0x1b4] sm:$0xf]
    %v551 = vld [vmem:[%s3 + $0x1b8] sm:$0xf]
    %v552 = vld [vmem:[%s3 + $0x1bc] sm:$0xf]
    %v553 = vld [vmem:[%s3 + $0x1c0] sm:$0xf]
    %v554 = vld [vmem:[%s3 + $0x1c4] sm:$0xf]
    %v555 = vld [vmem:[%s3 + $0x1c8] sm:$0xf]
    %v556 = vld [vmem:[%s3 + $0x1cc] sm:$0xf]
    %v557 = vld [vmem:[%s3 + $0x1d0] sm:$0xf]
    %v558 = vld [vmem:[%s3 + $0x1d4] sm:$0xf]
    %v559 = vld [vmem:[%s3 + $0x1d8] sm:$0xf]
    %v560 = vld [vmem:[%s3 + $0x1dc] sm:$0xf]
    %v561 = vld [vmem:[%s3 + $0x1e0] sm:$0xf]
    %v562 = vld [vmem:[%s3 + $0x1e4] sm:$0xf]
    %v563 = vld [vmem:[%s3 + $0x1e8] sm:$0xf]
    %v564 = vld [vmem:[%s3 + $0x1ec] sm:$0xf]
    %v565 = vld [vmem:[%s3 + $0x1f0] sm:$0xf]
    %v566 = vld [vmem:[%s3 + $0x1f4] sm:$0xf]
    %v567 = vld [vmem:[%s3 + $0x1f8] sm:$0xf]
    %v568 = vld [vmem:[%s3 + $0x1fc] sm:$0xf]
    %v569 = vld [vmem:[%s4] sm:$0x1]
    %v571 = vlaneseq
    %v572 = vshrl.u32 %v571, 7
    %v573 = vsub.s32 0, %v572
    %v574 = vrot.slane %v569, %v573
    %v704 = vunpack.c.l.b16 %v441
    %v705 = vunpack.c.l.b16 %v442
    %v706 = vunpack.c.l.b16 %v443
    %v707 = vunpack.c.l.b16 %v444
    %v708 = vunpack.c.l.b16 %v445
    %v709 = vunpack.c.l.b16 %v446
    %v710 = vunpack.c.l.b16 %v447
    %v711 = vunpack.c.l.b16 %v448
    %v712 = vunpack.c.l.b16 %v449
    %v713 = vunpack.c.l.b16 %v450
    %v714 = vunpack.c.l.b16 %v451
    %v715 = vunpack.c.l.b16 %v452
    %v716 = vunpack.c.l.b16 %v453
    %v717 = vunpack.c.l.b16 %v454
    %v718 = vunpack.c.l.b16 %v455
    %v719 = vunpack.c.l.b16 %v456
    %v720 = vunpack.c.l.b16 %v457
    %v721 = vunpack.c.l.b16 %v458
    %v722 = vunpack.c.l.b16 %v459
    %v723 = vunpack.c.l.b16 %v460
    %v724 = vunpack.c.l.b16 %v461
    %v725 = vunpack.c.l.b16 %v462
    %v726 = vunpack.c.l.b16 %v463
    %v727 = vunpack.c.l.b16 %v464
    %v728 = vunpack.c.l.b16 %v465
    %v729 = vunpack.c.l.b16 %v466
    %v730 = vunpack.c.l.b16 %v467
    %v731 = vunpack.c.l.b16 %v468
    %v732 = vunpack.c.l.b16 %v469
    %v733 = vunpack.c.l.b16 %v470
    %v734 = vunpack.c.l.b16 %v471
    %v735 = vunpack.c.l.b16 %v472
    %v736 = vunpack.c.l.b16 %v473
    %v737 = vunpack.c.l.b16 %v474
    %v738 = vunpack.c.l.b16 %v475
    %v739 = vunpack.c.l.b16 %v476
    %v740 = vunpack.c.l.b16 %v477
    %v741 = vunpack.c.l.b16 %v478
    %v742 = vunpack.c.l.b16 %v479
    %v743 = vunpack.c.l.b16 %v480
    %v744 = vunpack.c.l.b16 %v481
    %v745 = vunpack.c.l.b16 %v482
    %v746 = vunpack.c.l.b16 %v483
    %v747 = vunpack.c.l.b16 %v484
    %v748 = vunpack.c.l.b16 %v485
    %v749 = vunpack.c.l.b16 %v486
    %v750 = vunpack.c.l.b16 %v487
    %v751 = vunpack.c.l.b16 %v488
    %v752 = vunpack.c.l.b16 %v489
    %v753 = vunpack.c.l.b16 %v490
    %v754 = vunpack.c.l.b16 %v491
    %v755 = vunpack.c.l.b16 %v492
    %v756 = vunpack.c.l.b16 %v493
    %v757 = vunpack.c.l.b16 %v494
    %v758 = vunpack.c.l.b16 %v495
    %v759 = vunpack.c.l.b16 %v496
    %v760 = vunpack.c.l.b16 %v497
    %v761 = vunpack.c.l.b16 %v498
    %v762 = vunpack.c.l.b16 %v499
    %v763 = vunpack.c.l.b16 %v500
    %v764 = vunpack.c.l.b16 %v501
    %v765 = vunpack.c.l.b16 %v502
    %v766 = vunpack.c.l.b16 %v503
    %v767 = vunpack.c.l.b16 %v504
    %v768 = vunpack.c.l.b16 %v505
    %v769 = vunpack.c.l.b16 %v506
    %v770 = vunpack.c.l.b16 %v507
    %v771 = vunpack.c.l.b16 %v508
    %v772 = vunpack.c.l.b16 %v509
    %v773 = vunpack.c.l.b16 %v510
    %v774 = vunpack.c.l.b16 %v511
    %v775 = vunpack.c.l.b16 %v512
    %v776 = vunpack.c.l.b16 %v513
    %v777 = vunpack.c.l.b16 %v514
    %v778 = vunpack.c.l.b16 %v515
    %v779 = vunpack.c.l.b16 %v516
    %v780 = vunpack.c.l.b16 %v517
    %v781 = vunpack.c.l.b16 %v518
    %v782 = vunpack.c.l.b16 %v519
    %v783 = vunpack.c.l.b16 %v520
    %v784 = vunpack.c.l.b16 %v521
    %v785 = vunpack.c.l.b16 %v522
    %v786 = vunpack.c.l.b16 %v523
    %v787 = vunpack.c.l.b16 %v524
    %v788 = vunpack.c.l.b16 %v525
    %v789 = vunpack.c.l.b16 %v526
    %v790 = vunpack.c.l.b16 %v527
    %v791 = vunpack.c.l.b16 %v528
    %v792 = vunpack.c.l.b16 %v529
    %v793 = vunpack.c.l.b16 %v530
    %v794 = vunpack.c.l.b16 %v531
    %v795 = vunpack.c.l.b16 %v532
    %v796 = vunpack.c.l.b16 %v533
    %v797 = vunpack.c.l.b16 %v534
    %v798 = vunpack.c.l.b16 %v535
    %v799 = vunpack.c.l.b16 %v536
    %v800 = vunpack.c.l.b16 %v537
    %v801 = vunpack.c.l.b16 %v538
    %v802 = vunpack.c.l.b16 %v539
    %v803 = vunpack.c.l.b16 %v540
    %v804 = vunpack.c.l.b16 %v541
    %v805 = vunpack.c.l.b16 %v542
    %v806 = vunpack.c.l.b16 %v543
    %v807 = vunpack.c.l.b16 %v544
    %v808 = vunpack.c.l.b16 %v545
    %v809 = vunpack.c.l.b16 %v546
    %v810 = vunpack.c.l.b16 %v547
    %v811 = vunpack.c.l.b16 %v548
    %v812 = vunpack.c.l.b16 %v549
    %v813 = vunpack.c.l.b16 %v550
    %v814 = vunpack.c.l.b16 %v551
    %v815 = vunpack.c.l.b16 %v552
    %v816 = vunpack.c.l.b16 %v553
    %v817 = vunpack.c.l.b16 %v554
    %v818 = vunpack.c.l.b16 %v555
    %v819 = vunpack.c.l.b16 %v556
    %v820 = vunpack.c.l.b16 %v557
    %v821 = vunpack.c.l.b16 %v558
    %v822 = vunpack.c.l.b16 %v559
    %v823 = vunpack.c.l.b16 %v560
    %v824 = vunpack.c.l.b16 %v561
    %v825 = vunpack.c.l.b16 %v562
    %v826 = vunpack.c.l.b16 %v563
    %v827 = vunpack.c.l.b16 %v564
    %v828 = vunpack.c.l.b16 %v565
    %v829 = vunpack.c.l.b16 %v566
    %v830 = vunpack.c.l.b16 %v567
    %v831 = vunpack.c.l.b16 %v568
    %v832 = vpack.c.b16 %v705, %v704
    %v833 = vpack.c.b16 %v707, %v706
    %v834 = vpack.c.b16 %v709, %v708
    %v835 = vpack.c.b16 %v711, %v710
    %v836 = vpack.c.b16 %v713, %v712
    %v837 = vpack.c.b16 %v715, %v714
    %v838 = vpack.c.b16 %v717, %v716
    %v839 = vpack.c.b16 %v719, %v718
    %v840 = vpack.c.b16 %v721, %v720
    %v841 = vpack.c.b16 %v723, %v722
    %v842 = vpack.c.b16 %v725, %v724
    %v843 = vpack.c.b16 %v727, %v726
    %v844 = vpack.c.b16 %v729, %v728
    %v845 = vpack.c.b16 %v731, %v730
    %v846 = vpack.c.b16 %v733, %v732
    %v847 = vpack.c.b16 %v735, %v734
    %v848 = vpack.c.b16 %v737, %v736
    %v849 = vpack.c.b16 %v739, %v738
    %v850 = vpack.c.b16 %v741, %v740
    %v851 = vpack.c.b16 %v743, %v742
    %v852 = vpack.c.b16 %v745, %v744
    %v853 = vpack.c.b16 %v747, %v746
    %v854 = vpack.c.b16 %v749, %v748
    %v855 = vpack.c.b16 %v751, %v750
    %v856 = vpack.c.b16 %v753, %v752
    %v857 = vpack.c.b16 %v755, %v754
    %v858 = vpack.c.b16 %v757, %v756
    %v859 = vpack.c.b16 %v759, %v758
    %v860 = vpack.c.b16 %v761, %v760
    %v861 = vpack.c.b16 %v763, %v762
    %v862 = vpack.c.b16 %v765, %v764
    %v863 = vpack.c.b16 %v767, %v766
    %v864 = vpack.c.b16 %v769, %v768
    %v865 = vpack.c.b16 %v771, %v770
    %v866 = vpack.c.b16 %v773, %v772
    %v867 = vpack.c.b16 %v775, %v774
    %v868 = vpack.c.b16 %v777, %v776
    %v869 = vpack.c.b16 %v779, %v778
    %v870 = vpack.c.b16 %v781, %v780
    %v871 = vpack.c.b16 %v783, %v782
    %v872 = vpack.c.b16 %v785, %v784
    %v873 = vpack.c.b16 %v787, %v786
    %v874 = vpack.c.b16 %v789, %v788
    %v875 = vpack.c.b16 %v791, %v790
    %v876 = vpack.c.b16 %v793, %v792
    %v877 = vpack.c.b16 %v795, %v794
    %v878 = vpack.c.b16 %v797, %v796
    %v879 = vpack.c.b16 %v799, %v798
    %v880 = vpack.c.b16 %v801, %v800
    %v881 = vpack.c.b16 %v803, %v802
    %v882 = vpack.c.b16 %v805, %v804
    %v883 = vpack.c.b16 %v807, %v806
    %v884 = vpack.c.b16 %v809, %v808
    %v885 = vpack.c.b16 %v811, %v810
    %v886 = vpack.c.b16 %v813, %v812
    %v887 = vpack.c.b16 %v815, %v814
    %v888 = vpack.c.b16 %v817, %v816
    %v889 = vpack.c.b16 %v819, %v818
    %v890 = vpack.c.b16 %v821, %v820
    %v891 = vpack.c.b16 %v823, %v822
    %v892 = vpack.c.b16 %v825, %v824
    %v893 = vpack.c.b16 %v827, %v826
    %v894 = vpack.c.b16 %v829, %v828
    %v895 = vpack.c.b16 %v831, %v830
    %960 = vmatprep.subr.bf16.mxu0 0
    %961 = vmatpush1.bf16.msra.mxu0 %v839
    %962 = vmatprep.subr.bf16.mxu0 0
    %963 = vmatpush1.bf16.msra.mxu0 %v838
    %964 = vmatprep.subr.bf16.mxu0 0
    %965 = vmatpush1.bf16.msra.mxu0 %v837
    %966 = vmatprep.subr.bf16.mxu0 0
    %967 = vmatpush1.bf16.msra.mxu0 %v836
    %968 = vmatprep.subr.bf16.mxu0 0
    %969 = vmatpush1.bf16.msra.mxu0 %v835
    %970 = vmatprep.subr.bf16.mxu0 0
    %971 = vmatpush1.bf16.msra.mxu0 %v834
    %972 = vmatprep.subr.bf16.mxu0 0
    %973 = vmatpush1.bf16.msra.mxu0 %v833
    %974 = vmatprep.subr.bf16.mxu0 0
    %975 = vmatpush1.bf16.msra.mxu0 %v832
    %976 = vmatprep.subr.bf16.mxu0 0
    %977 = vmatpush2.bf16.msra.mxu0 %v847
    %978 = vmatprep.subr.bf16.mxu0 0
    %979 = vmatpush2.bf16.msra.mxu0 %v846
    %980 = vmatprep.subr.bf16.mxu0 0
    %981 = vmatpush2.bf16.msra.mxu0 %v845
    %982 = vmatprep.subr.bf16.mxu0 0
    %983 = vmatpush2.bf16.msra.mxu0 %v844
    %984 = vmatprep.subr.bf16.mxu0 0
    %985 = vmatpush2.bf16.msra.mxu0 %v843
    %986 = vmatprep.subr.bf16.mxu0 0
    %987 = vmatpush2.bf16.msra.mxu0 %v842
    %988 = vmatprep.subr.bf16.mxu0 0
    %989 = vmatpush2.bf16.msra.mxu0 %v841
    %990 = vmatprep.subr.bf16.mxu0 0
    %991 = vmatpush2.bf16.msra.mxu0 %v840
    %992 = vmatprep.mubr.bf16.mxu0 %v434
    %993 = vmatmul.mubr.bf16.gmra.mxu0 %v433
    %v994 = vpop.f32.mrf.mxu0
    %v995 = vadd.f32 %v574, %v994
    %v996 = vpop.f32.mrf.mxu0
    %v997 = vpop.f32.mrf.mxu0
    %v998 = vpop.f32.mrf.mxu0
    %999 = vdwg.mxu0
    %1000 = vmatprep.subr.bf16.mxu0 0
    %1001 = vmatpush1.bf16.msra.mxu0 %v855
    %1002 = vmatprep.subr.bf16.mxu0 0
    %1003 = vmatpush1.bf16.msra.mxu0 %v854
    %1004 = vmatprep.subr.bf16.mxu0 0
    %1005 = vmatpush1.bf16.msra.mxu0 %v853
    %1006 = vmatprep.subr.bf16.mxu0 0
    %1007 = vmatpush1.bf16.msra.mxu0 %v852
    %1008 = vmatprep.subr.bf16.mxu0 0
    %1009 = vmatpush1.bf16.msra.mxu0 %v851
    %1010 = vmatprep.subr.bf16.mxu0 0
    %1011 = vmatpush1.bf16.msra.mxu0 %v850
    %1012 = vmatprep.subr.bf16.mxu0 0
    %1013 = vmatpush1.bf16.msra.mxu0 %v849
    %1014 = vmatprep.subr.bf16.mxu0 0
    %1015 = vmatpush1.bf16.msra.mxu0 %v848
    %1016 = vmatprep.subr.bf16.mxu0 0
    %1017 = vmatpush2.bf16.msra.mxu0 %v863
    %1018 = vmatprep.subr.bf16.mxu0 0
    %1019 = vmatpush2.bf16.msra.mxu0 %v862
    %1020 = vmatprep.subr.bf16.mxu0 0
    %1021 = vmatpush2.bf16.msra.mxu0 %v861
    %1022 = vmatprep.subr.bf16.mxu0 0
    %1023 = vmatpush2.bf16.msra.mxu0 %v860
    %1024 = vmatprep.subr.bf16.mxu0 0
    %1025 = vmatpush2.bf16.msra.mxu0 %v859
    %1026 = vmatprep.subr.bf16.mxu0 0
    %1027 = vmatpush2.bf16.msra.mxu0 %v858
    %1028 = vmatprep.subr.bf16.mxu0 0
    %1029 = vmatpush2.bf16.msra.mxu0 %v857
    %1030 = vmatprep.subr.bf16.mxu0 0
    %1031 = vmatpush2.bf16.msra.mxu0 %v856
    %1032 = vmatprep.mubr.bf16.mxu0 %v436
    %1033 = vmatmul.mubr.bf16.gmra.mxu0 %v435
    %v1034 = vpop.f32.mrf.mxu0
    %v1035 = vadd.f32 %v995, %v1034
    %v1036 = vpop.f32.mrf.mxu0
    %v1037 = vpop.f32.mrf.mxu0
    %v1038 = vpop.f32.mrf.mxu0
    %1039 = vdwg.mxu0
    %1040 = vmatprep.subr.bf16.mxu0 0
    %1041 = vmatpush1.bf16.msra.mxu0 %v871
    %1042 = vmatprep.subr.bf16.mxu0 0
    %1043 = vmatpush1.bf16.msra.mxu0 %v870
    %1044 = vmatprep.subr.bf16.mxu0 0
    %1045 = vmatpush1.bf16.msra.mxu0 %v869
    %1046 = vmatprep.subr.bf16.mxu0 0
    %1047 = vmatpush1.bf16.msra.mxu0 %v868
    %1048 = vmatprep.subr.bf16.mxu0 0
    %1049 = vmatpush1.bf16.msra.mxu0 %v867
    %1050 = vmatprep.subr.bf16.mxu0 0
    %1051 = vmatpush1.bf16.msra.mxu0 %v866
    %1052 = vmatprep.subr.bf16.mxu0 0
    %1053 = vmatpush1.bf16.msra.mxu0 %v865
    %1054 = vmatprep.subr.bf16.mxu0 0
    %1055 = vmatpush1.bf16.msra.mxu0 %v864
    %1056 = vmatprep.subr.bf16.mxu0 0
    %1057 = vmatpush2.bf16.msra.mxu0 %v879
    %1058 = vmatprep.subr.bf16.mxu0 0
    %1059 = vmatpush2.bf16.msra.mxu0 %v878
    %1060 = vmatprep.subr.bf16.mxu0 0
    %1061 = vmatpush2.bf16.msra.mxu0 %v877
    %1062 = vmatprep.subr.bf16.mxu0 0
    %1063 = vmatpush2.bf16.msra.mxu0 %v876
    %1064 = vmatprep.subr.bf16.mxu0 0
    %1065 = vmatpush2.bf16.msra.mxu0 %v875
    %1066 = vmatprep.subr.bf16.mxu0 0
    %1067 = vmatpush2.bf16.msra.mxu0 %v874
    %1068 = vmatprep.subr.bf16.mxu0 0
    %1069 = vmatpush2.bf16.msra.mxu0 %v873
    %1070 = vmatprep.subr.bf16.mxu0 0
    %1071 = vmatpush2.bf16.msra.mxu0 %v872
    %1072 = vmatprep.mubr.bf16.mxu0 %v438
    %1073 = vmatmul.mubr.bf16.gmra.mxu0 %v437
    %v1074 = vpop.f32.mrf.mxu0
    %v1075 = vadd.f32 %v1035, %v1074
    %v1076 = vpop.f32.mrf.mxu0
    %v1077 = vpop.f32.mrf.mxu0
    %v1078 = vpop.f32.mrf.mxu0
    %1079 = vdwg.mxu0
    %1080 = vmatprep.subr.bf16.mxu0 0
    %1081 = vmatpush1.bf16.msra.mxu0 %v887
    %1082 = vmatprep.subr.bf16.mxu0 0
    %1083 = vmatpush1.bf16.msra.mxu0 %v886
    %1084 = vmatprep.subr.bf16.mxu0 0
    %1085 = vmatpush1.bf16.msra.mxu0 %v885
    %1086 = vmatprep.subr.bf16.mxu0 0
    %1087 = vmatpush1.bf16.msra.mxu0 %v884
    %1088 = vmatprep.subr.bf16.mxu0 0
    %1089 = vmatpush1.bf16.msra.mxu0 %v883
    %1090 = vmatprep.subr.bf16.mxu0 0
    %1091 = vmatpush1.bf16.msra.mxu0 %v882
    %1092 = vmatprep.subr.bf16.mxu0 0
    %1093 = vmatpush1.bf16.msra.mxu0 %v881
    %1094 = vmatprep.subr.bf16.mxu0 0
    %1095 = vmatpush1.bf16.msra.mxu0 %v880
    %1096 = vmatprep.subr.bf16.mxu0 0
    %1097 = vmatpush2.bf16.msra.mxu0 %v895
    %1098 = vmatprep.subr.bf16.mxu0 0
    %1099 = vmatpush2.bf16.msra.mxu0 %v894
    %1100 = vmatprep.subr.bf16.mxu0 0
    %1101 = vmatpush2.bf16.msra.mxu0 %v893
    %1102 = vmatprep.subr.bf16.mxu0 0
    %1103 = vmatpush2.bf16.msra.mxu0 %v892
    %1104 = vmatprep.subr.bf16.mxu0 0
    %1105 = vmatpush2.bf16.msra.mxu0 %v891
    %1106 = vmatprep.subr.bf16.mxu0 0
    %1107 = vmatpush2.bf16.msra.mxu0 %v890
    %1108 = vmatprep.subr.bf16.mxu0 0
    %1109 = vmatpush2.bf16.msra.mxu0 %v889
    %1110 = vmatprep.subr.bf16.mxu0 0
    %1111 = vmatpush2.bf16.msra.mxu0 %v888
    %1112 = vmatprep.mubr.bf16.mxu0 %v440
    %1113 = vmatmul.mubr.bf16.gmra.mxu0 %v439
    %v1114 = vpop.f32.mrf.mxu0
    %v1115 = vadd.f32 %v1075, %v1114
    %v1116 = vpop.f32.mrf.mxu0
    %v1117 = vpop.f32.mrf.mxu0
    %v1118 = vpop.f32.mrf.mxu0
    %1119 = vdwg.mxu0
    %1121 = vset.pattern.permute.xlu0 0
    %1122 = vperm.xlu0 %1121, %v1115
    %v1123 = vpop.permute.xlu0 %1122
    %v1125 = vadd.f32 %v1123, %v1115
    %1126 = vrot.lane.b32.xlu0 %v1115, 127
    %v1127 = vpop.permute.xlu0 %1126
    %vm1129 = vcmask 41984
    %v1130 = vsel %vm1129, %v1127, 0.0
    %1131 = vadd.xlane.f32.xlu0 %v1130
    %v1132 = vpop.xlane.xlu0 %1131
    %v1133 = vrcp.pop 6.0
    %v1134 = vmul.f32 %v1132, %v1133
    %v1135 = vsub.f32 %v1125, %v1134
    %1137 = vrot.lane.b32.xlu0 %v1135, 127
    %v1138 = vpop.permute.xlu0 %1137
    %1140 = vst.msk [vmem:[#allocation2] sm:$0x3] %vm1129, %v1138
    // Predicated region
    $region22: #{dueling_dqn_forward.7} parent=1 // pred_check
      _
    $region23: #{dueling_dqn_forward.7} parent=1 // pred_check_branch
      %1142 = sbr.rel (0) target = $region25
    $region24: #{dueling_dqn_forward.7} parent=1 // pred_region
      %s1144 = ssub.s32 32, 32
      %1145 = vsyncadd [#allocation3], %s1144
      %s1147 = sshll.u32 [#allocation2], 4
      %s1148 = int_to_ptr.vmem [resolvable:$true] %s1147
      %1150 = dma.vmem_to_hbm [thread:$0]  %s1148, 32, %s5, [#allocation3]
    $region25: #{dueling_dqn_forward.7} parent=1 // pred_fallthru
      _
    // Predicated region
    $region26: #{dueling_dqn_forward.7} parent=1 // pred_check
      _
    $region27: #{dueling_dqn_forward.7} parent=1 // pred_check_branch
      %1152 = sbr.rel (0) target = $region29
    $region28: #{dueling_dqn_forward.7} parent=1 // pred_region
      %1153 = dma.done [#allocation3], 32
    $region29: #{dueling_dqn_forward.7} parent=1 // pred_fallthru
      _
    %1154 = vsyncpa [#allocation3], 1

</llo_original>
